<compile_context>
chip_gen: v5e
topology: v5e:2x2
jax: 0.10.0
libtpu: 0.0.40
codegen_flags: <defaults>
</compile_context>

<pallas_src>
import math

import jax
import jax.numpy as jnp
from jax.experimental import pallas as pl
from jax.experimental.pallas import tpu as pltpu


# ---------------------------------------------------------------------------
# Fused Pallas kernel
# ---------------------------------------------------------------------------
def make_grunet_kernel(n_layers, T, Bp, H, use_bf16_matmul=False):
    """Builds the fused GRUNet kernel (closure over static dimensions).

    Ref layout (positional):
      x_ref     : (T*Bp, Din0)  time-major flattened (batch-padded) input rows
      h0_ref    : (n_layers, Bp, H) initial hidden states
      per layer : wih (Din_l, 3H), whh (H, 3H),
                  bg  (1, 3H)  = bih with b_hr/b_hz folded into the r/z blocks,
                  bhn (1, H)   = b_hn (must stay inside r*( . ))
                  gate order along the 3H axis is [r | z | n] (PyTorch order)
      fc_w_ref  : (H, O), fc_b_ref : (1, O)
      o_ref     : (Bp, O) output
      y_scr     : (T*Bp, H) VMEM scratch for inter-layer activations
    """
    mx_dtype = jnp.bfloat16 if use_bf16_matmul else jnp.float32

    def kernel(*refs):
        x_ref, h0_ref = refs[0], refs[1]
        layer_refs = refs[2:2 + 4 * n_layers]
        fc_w_ref, fc_b_ref, o_ref, y_scr = refs[2 + 4 * n_layers:]

        xin = x_ref[...].astype(mx_dtype)              # (T*Bp, Din) layer-0 input
        h = None
        for l in range(n_layers):
            wih, whh, bg, bhn = layer_refs[4 * l:4 * (l + 1)]

            # ---- Hoisted, loop-invariant loads / broadcasts (once per layer).
            wih_v = wih[...].astype(mx_dtype)          # (Din, 3H)
            whh_v = whh[...].astype(mx_dtype)          # (H, 3H)
            bhn_b = jnp.broadcast_to(bhn[...], (Bp, H))  # n-gate hidden bias

            # ---- Hoisted input projection: one matmul covers every timestep.
            #      r/z hidden biases are already folded into bg.
            gi_all = jnp.dot(xin, wih_v,
                             preferred_element_type=jnp.float32) + bg[...]

            h = h0_ref[l]                              # (Bp, H) f32 initial hidden
            for t in range(T):                         # fully unrolled (small static T)
                gi = gi_all[t * Bp:(t + 1) * Bp, :]    # sublane-aligned static slice
                gh = jnp.dot(h.astype(mx_dtype), whh_v,
                             preferred_element_type=jnp.float32)      # (Bp, 3H)
                rz = jax.nn.sigmoid(gi[:, :2 * H] + gh[:, :2 * H])    # one EUP push
                r = rz[:, :H]
                z = rz[:, H:]
                n = jnp.tanh(gi[:, 2 * H:] + r * (gh[:, 2 * H:] + bhn_b))
                h = n + z * (h - n)                    # == (1 - z)*n + z*h
                if l + 1 < n_layers:
                    y_scr[pl.ds(t * Bp, Bp), :] = h    # aligned whole-sublane store
            if l + 1 < n_layers:
                xin = y_scr[...].astype(mx_dtype)      # next layer's (T*Bp, H) input

        # FC + Softplus epilogue on the last timestep of the top layer
        # (PyTorch Softplus: beta=1, threshold=20).  Kept in f32.
        zfc = jnp.dot(h, fc_w_ref[...],
                      preferred_element_type=jnp.float32) + fc_b_ref[...]
        o_ref[...] = jnp.where(zfc > 20.0, zfc,
                               jnp.log1p(jnp.exp(jnp.minimum(zfc, 20.0))))

    return kernel


# ---------------------------------------------------------------------------
# Wrapper
# ---------------------------------------------------------------------------
def grunet_forward(params, X, h=None, use_bf16_matmul=False):
    """X: (B, T, input_dim) batch-first, matching the PyTorch module."""
    B, T, Din = X.shape
    layers = params["gru"]
    n_layers = len(layers)
    H = layers[0]["whh"].shape[0]
    O = params["fc_w"].shape[-1]

    # Pad batch up to a sublane multiple (8): all per-timestep slices / stores
    # in the recurrence become whole-sublane accesses (free — the MXU rows were
    # already padded to 8 internally).  Padded rows are sliced off at the end.
    Bp = max(8, ((B + 7) // 8) * 8)

    if h is None:                          # init_hidden: zeros
        h0 = jnp.zeros((n_layers, Bp, H), jnp.float32)
    else:
        h0 = jnp.pad(h.astype(jnp.float32), ((0, 0), (0, Bp - B), (0, 0)))

    # Time-major flatten once in the wrapper so the kernel only sees
    # lane/sublane-friendly 2-D operands.
    Xp = jnp.pad(X.astype(jnp.float32), ((0, Bp - B), (0, 0), (0, 0)))
    x_flat = jnp.transpose(Xp, (1, 0, 2)).reshape(T * Bp, Din)

    args = [x_flat, h0]
    for lp in layers:
        bih, bhh = lp["bih"], lp["bhh"]
        # Fold the r/z hidden biases into the hoisted input projection; only
        # the n-gate hidden bias must stay inside r*( . ).
        bg = jnp.concatenate([bih[:, :2 * H] + bhh[:, :2 * H], bih[:, 2 * H:]],
                             axis=-1)                         # (1, 3H)
        bhn = bhh[:, 2 * H:]                                  # (1, H)
        args += [lp["wih"], lp["whh"], bg, bhn]
    args += [params["fc_w"], params["fc_b"]]

    # Single fused, gridless kernel: at these shapes everything (a few tens of
    # KB) is VMEM-resident, so no pipelining / double-buffering is needed and
    # there is exactly one tiny HBM store (the (Bp, O) result).
    out = pl.pallas_call(
        make_grunet_kernel(n_layers, T, Bp, H, use_bf16_matmul),
        out_shape=jax.ShapeDtypeStruct((Bp, O), jnp.float32),
        scratch_shapes=[pltpu.VMEM((T * Bp, H), jnp.float32)],
    )(*args)
    return out[:B]


# ---------------------------------------------------------------------------
# Pure-JAX reference (for correctness check)
# ---------------------------------------------------------------------------
def grunet_reference(params, X, h=None):
    B, T, Din = X.shape
    layers = params["gru"]
    n_layers = len(layers)
    H = layers[0]["whh"].shape[0]
    if h is None:
        h = jnp.zeros((n_layers, B, H), jnp.float32)
    x = jnp.transpose(X, (1, 0, 2))                        # (T, B, Din)
    for l, lp in enumerate(layers):
        hs = h[l]
        ys = []
        for t in range(T):
            gi = x[t] @ lp["wih"] + lp["bih"]
            gh = hs @ lp["whh"] + lp["bhh"]
            r = jax.nn.sigmoid(gi[:, :H] + gh[:, :H])
            z = jax.nn.sigmoid(gi[:, H:2 * H] + gh[:, H:2 * H])
            n = jnp.tanh(gi[:, 2 * H:] + r * gh[:, 2 * H:])
            hs = (1.0 - z) * n + z * hs
            ys.append(hs)
        x = jnp.stack(ys, 0)
    return jax.nn.softplus(x[-1] @ params["fc_w"] + params["fc_b"])


# ---------------------------------------------------------------------------
# Deterministic parameter init (shapes derived from GRUNet.__init__)
# ---------------------------------------------------------------------------
def init_params(key, input_dim, hidden_dim, output_dim, n_layers):
    k = 1.0 / math.sqrt(float(hidden_dim))
    params = {"gru": []}
    for layer_idx in range(n_layers):
        din = input_dim if layer_idx == 0 else hidden_dim
        key, k1, k2, k3, k4 = jax.random.split(key, 5)
        params["gru"].append({
            # gate order along the 3H axis: [r | z | n], matching nn.GRU
            "wih": jax.random.uniform(k1, (din, 3 * hidden_dim), jnp.float32, -k, k),
            "whh": jax.random.uniform(k2, (hidden_dim, 3 * hidden_dim), jnp.float32, -k, k),
            "bih": jax.random.uniform(k3, (1, 3 * hidden_dim), jnp.float32, -k, k),
            "bhh": jax.random.uniform(k4, (1, 3 * hidden_dim), jnp.float32, -k, k),
        })
    key, k1, k2 = jax.random.split(key, 3)
    params["fc_w"] = jax.random.uniform(k1, (hidden_dim, output_dim), jnp.float32, -k, k)
    params["fc_b"] = jax.random.uniform(k2, (1, output_dim), jnp.float32, -k, k)
    return params


if __name__ == "__main__":
    B, T, INPUT_DIM, HIDDEN_DIM, OUTPUT_DIM, N_LAYERS = 2, 8, 4, 32, 3, 2
    key = jax.random.PRNGKey(0)
    kx, kp, kh = jax.random.split(key, 3)
    X = jax.random.normal(kx, (B, T, INPUT_DIM), jnp.float32)
    params = init_params(kp, INPUT_DIM, HIDDEN_DIM, OUTPUT_DIM, N_LAYERS)

    # Default path: h=None -> zero init_hidden (f32 MXU operands).
    out = jax.block_until_ready(grunet_forward(params, X))
    ref = grunet_reference(params, X)
    assert out.shape == (B, OUTPUT_DIM), out.shape
    assert bool(jnp.allclose(out, ref, atol=1e-4, rtol=1e-4)), (out, ref)

    # Explicit initial hidden state path.
    h0 = 0.1 * jax.random.normal(kh, (N_LAYERS, B, HIDDEN_DIM), jnp.float32)
    out_h = jax.block_until_ready(grunet_forward(params, X, h0))
    ref_h = grunet_reference(params, X, h0)
    assert bool(jnp.allclose(out_h, ref_h, atol=1e-4, rtol=1e-4)), (out_h, ref_h)

    # bf16 MXU-operand path (the v6e/v7x lever): f32 accumulation + f32 gate
    # math, so only operand rounding differs -> loose tolerance vs f32 ref.
    out_bf = jax.block_until_ready(grunet_forward(params, X, use_bf16_matmul=True))
    assert out_bf.shape == (B, OUTPUT_DIM), out_bf.shape
    assert bool(jnp.allclose(out_bf, ref, atol=5e-2, rtol=5e-2)), (out_bf, ref)

    print("KERNEL_OK")
</pallas_src>

<mosaic_0001>
module attributes {stable_mosaic.version = 11 : i64} {
  func.func @kernel(%arg0: memref<64x4xf32, #tpu.memory_space<vmem>>, %arg1: memref<2x8x32xf32, #tpu.memory_space<vmem>>, %arg2: memref<4x96xf32, #tpu.memory_space<vmem>>, %arg3: memref<32x96xf32, #tpu.memory_space<vmem>>, %arg4: memref<1x96xf32, #tpu.memory_space<vmem>>, %arg5: memref<1x32xf32, #tpu.memory_space<vmem>>, %arg6: memref<32x96xf32, #tpu.memory_space<vmem>>, %arg7: memref<32x96xf32, #tpu.memory_space<vmem>>, %arg8: memref<1x96xf32, #tpu.memory_space<vmem>>, %arg9: memref<1x32xf32, #tpu.memory_space<vmem>>, %arg10: memref<32x3xf32, #tpu.memory_space<vmem>>, %arg11: memref<1x3xf32, #tpu.memory_space<vmem>>, %arg12: memref<8x3xf32, #tpu.memory_space<vmem>>, %arg13: memref<64x32xf32, #tpu.memory_space<vmem>>) attributes {dimension_semantics = [], scalar_prefetch = 0 : i64, scratch_operands = 1 : i64, tpu.core_type = #tpu.core_type<tc>} {
    %c0 = arith.constant 0 : index
    %c0_0 = arith.constant 0 : index
    %0 = vector.load %arg0[%c0, %c0_0] : memref<64x4xf32, #tpu.memory_space<vmem>>, vector<64x4xf32>
    %c0_1 = arith.constant 0 : index
    %c0_2 = arith.constant 0 : index
    %1 = vector.load %arg2[%c0_1, %c0_2] : memref<4x96xf32, #tpu.memory_space<vmem>>, vector<4x96xf32>
    %c0_3 = arith.constant 0 : index
    %c0_4 = arith.constant 0 : index
    %2 = vector.load %arg3[%c0_3, %c0_4] : memref<32x96xf32, #tpu.memory_space<vmem>>, vector<32x96xf32>
    %c0_5 = arith.constant 0 : index
    %c0_6 = arith.constant 0 : index
    %3 = vector.load %arg5[%c0_5, %c0_6] : memref<1x32xf32, #tpu.memory_space<vmem>>, vector<1x32xf32>
    %4 = vector.shape_cast %3 : vector<1x32xf32> to vector<1x32xf32>
    %5 = vector.broadcast %4 : vector<1x32xf32> to vector<8x32xf32>
    %cst = arith.constant dense<0.000000e+00> : vector<64x96xf32>
    %6 = tpu.matmul %0, %1, %cst {dimension_numbers = #tpu.dot_dimension_numbers<[1], [0], [0], [1], [0, 0, 1, 1], [], []>} : vector<64x4xf32>, vector<4x96xf32>, vector<64x96xf32> -> vector<64x96xf32>
    %c0_7 = arith.constant 0 : index
    %c0_8 = arith.constant 0 : index
    %7 = vector.load %arg4[%c0_7, %c0_8] : memref<1x96xf32, #tpu.memory_space<vmem>>, vector<1x96xf32>
    %8 = vector.broadcast %7 : vector<1x96xf32> to vector<64x96xf32>
    %9 = arith.addf %6, %8 : vector<64x96xf32>
    %c0_9 = arith.constant 0 : index
    %c0_10 = arith.constant 0 : index
    %c0_11 = arith.constant 0 : index
    %10 = vector.load %arg1[%c0_9, %c0_10, %c0_11] : memref<2x8x32xf32, #tpu.memory_space<vmem>>, vector<1x8x32xf32>
    %11 = vector.shape_cast %10 : vector<1x8x32xf32> to vector<8x32xf32>
    %12 = vector.extract_strided_slice %9 {offsets = [0, 0], sizes = [8, 96], strides = [1, 1]} : vector<64x96xf32> to vector<8x96xf32>
    %cst_12 = arith.constant dense<0.000000e+00> : vector<8x96xf32>
    %13 = tpu.matmul %11, %2, %cst_12 {dimension_numbers = #tpu.dot_dimension_numbers<[1], [0], [0], [1], [0, 0, 1, 1], [], []>} : vector<8x32xf32>, vector<32x96xf32>, vector<8x96xf32> -> vector<8x96xf32>
    %14 = vector.extract_strided_slice %12 {offsets = [0, 0], sizes = [8, 64], strides = [1, 1]} : vector<8x96xf32> to vector<8x64xf32>
    %15 = vector.extract_strided_slice %13 {offsets = [0, 0], sizes = [8, 64], strides = [1, 1]} : vector<8x96xf32> to vector<8x64xf32>
    %16 = arith.addf %14, %15 : vector<8x64xf32>
    %17 = arith.negf %16 : vector<8x64xf32>
    %18 = math.exp %17 : vector<8x64xf32>
    %cst_13 = arith.constant 1.000000e+00 : f32
    %19 = vector.broadcast %cst_13 : f32 to vector<8x64xf32>
    %20 = arith.addf %19, %18 : vector<8x64xf32>
    %21 = arith.divf %19, %20 : vector<8x64xf32>
    %22 = vector.extract_strided_slice %21 {offsets = [0, 0], sizes = [8, 32], strides = [1, 1]} : vector<8x64xf32> to vector<8x32xf32>
    %23 = vector.extract_strided_slice %21 {offsets = [0, 32], sizes = [8, 32], strides = [1, 1]} : vector<8x64xf32> to vector<8x32xf32>
    %24 = vector.extract_strided_slice %12 {offsets = [0, 64], sizes = [8, 32], strides = [1, 1]} : vector<8x96xf32> to vector<8x32xf32>
    %25 = vector.extract_strided_slice %13 {offsets = [0, 64], sizes = [8, 32], strides = [1, 1]} : vector<8x96xf32> to vector<8x32xf32>
    %26 = arith.addf %25, %5 : vector<8x32xf32>
    %27 = arith.mulf %22, %26 : vector<8x32xf32>
    %28 = arith.addf %24, %27 : vector<8x32xf32>
    %29 = math.tanh %28 : vector<8x32xf32>
    %30 = arith.subf %11, %29 : vector<8x32xf32>
    %31 = arith.mulf %23, %30 : vector<8x32xf32>
    %32 = arith.addf %29, %31 : vector<8x32xf32>
    %c0_14 = arith.constant 0 : index
    %c0_15 = arith.constant 0 : index
    %33 = vector.load %arg13[%c0_14, %c0_15] : memref<64x32xf32, #tpu.memory_space<vmem>>, vector<8x32xf32>
    tpu.vector_store %arg13[%c0_14, %c0_15], %32 {strides = array<i32>} : memref<64x32xf32, #tpu.memory_space<vmem>>, vector<8x32xf32>,
    %34 = vector.extract_strided_slice %9 {offsets = [8, 0], sizes = [8, 96], strides = [1, 1]} : vector<64x96xf32> to vector<8x96xf32>
    %cst_16 = arith.constant dense<0.000000e+00> : vector<8x96xf32>
    %35 = tpu.matmul %32, %2, %cst_16 {dimension_numbers = #tpu.dot_dimension_numbers<[1], [0], [0], [1], [0, 0, 1, 1], [], []>} : vector<8x32xf32>, vector<32x96xf32>, vector<8x96xf32> -> vector<8x96xf32>
    %36 = vector.extract_strided_slice %34 {offsets = [0, 0], sizes = [8, 64], strides = [1, 1]} : vector<8x96xf32> to vector<8x64xf32>
    %37 = vector.extract_strided_slice %35 {offsets = [0, 0], sizes = [8, 64], strides = [1, 1]} : vector<8x96xf32> to vector<8x64xf32>
    %38 = arith.addf %36, %37 : vector<8x64xf32>
    %39 = arith.negf %38 : vector<8x64xf32>
    %40 = math.exp %39 : vector<8x64xf32>
    %cst_17 = arith.constant 1.000000e+00 : f32
    %41 = vector.broadcast %cst_17 : f32 to vector<8x64xf32>
    %42 = arith.addf %41, %40 : vector<8x64xf32>
    %43 = arith.divf %41, %42 : vector<8x64xf32>
    %44 = vector.extract_strided_slice %43 {offsets = [0, 0], sizes = [8, 32], strides = [1, 1]} : vector<8x64xf32> to vector<8x32xf32>
    %45 = vector.extract_strided_slice %43 {offsets = [0, 32], sizes = [8, 32], strides = [1, 1]} : vector<8x64xf32> to vector<8x32xf32>
    %46 = vector.extract_strided_slice %34 {offsets = [0, 64], sizes = [8, 32], strides = [1, 1]} : vector<8x96xf32> to vector<8x32xf32>
    %47 = vector.extract_strided_slice %35 {offsets = [0, 64], sizes = [8, 32], strides = [1, 1]} : vector<8x96xf32> to vector<8x32xf32>
    %48 = arith.addf %47, %5 : vector<8x32xf32>
    %49 = arith.mulf %44, %48 : vector<8x32xf32>
    %50 = arith.addf %46, %49 : vector<8x32xf32>
    %51 = math.tanh %50 : vector<8x32xf32>
    %52 = arith.subf %32, %51 : vector<8x32xf32>
    %53 = arith.mulf %45, %52 : vector<8x32xf32>
    %54 = arith.addf %51, %53 : vector<8x32xf32>
    %c8 = arith.constant 8 : index
    %c0_18 = arith.constant 0 : index
    %55 = vector.load %arg13[%c8, %c0_18] : memref<64x32xf32, #tpu.memory_space<vmem>>, vector<8x32xf32>
    tpu.vector_store %arg13[%c8, %c0_18], %54 {strides = array<i32>} : memref<64x32xf32, #tpu.memory_space<vmem>>, vector<8x32xf32>,
    %56 = vector.extract_strided_slice %9 {offsets = [16, 0], sizes = [8, 96], strides = [1, 1]} : vector<64x96xf32> to vector<8x96xf32>
    %cst_19 = arith.constant dense<0.000000e+00> : vector<8x96xf32>
    %57 = tpu.matmul %54, %2, %cst_19 {dimension_numbers = #tpu.dot_dimension_numbers<[1], [0], [0], [1], [0, 0, 1, 1], [], []>} : vector<8x32xf32>, vector<32x96xf32>, vector<8x96xf32> -> vector<8x96xf32>
    %58 = vector.extract_strided_slice %56 {offsets = [0, 0], sizes = [8, 64], strides = [1, 1]} : vector<8x96xf32> to vector<8x64xf32>
    %59 = vector.extract_strided_slice %57 {offsets = [0, 0], sizes = [8, 64], strides = [1, 1]} : vector<8x96xf32> to vector<8x64xf32>
    %60 = arith.addf %58, %59 : vector<8x64xf32>
    %61 = arith.negf %60 : vector<8x64xf32>
    %62 = math.exp %61 : vector<8x64xf32>
    %cst_20 = arith.constant 1.000000e+00 : f32
    %63 = vector.broadcast %cst_20 : f32 to vector<8x64xf32>
    %64 = arith.addf %63, %62 : vector<8x64xf32>
    %65 = arith.divf %63, %64 : vector<8x64xf32>
    %66 = vector.extract_strided_slice %65 {offsets = [0, 0], sizes = [8, 32], strides = [1, 1]} : vector<8x64xf32> to vector<8x32xf32>
    %67 = vector.extract_strided_slice %65 {offsets = [0, 32], sizes = [8, 32], strides = [1, 1]} : vector<8x64xf32> to vector<8x32xf32>
    %68 = vector.extract_strided_slice %56 {offsets = [0, 64], sizes = [8, 32], strides = [1, 1]} : vector<8x96xf32> to vector<8x32xf32>
    %69 = vector.extract_strided_slice %57 {offsets = [0, 64], sizes = [8, 32], strides = [1, 1]} : vector<8x96xf32> to vector<8x32xf32>
    %70 = arith.addf %69, %5 : vector<8x32xf32>
    %71 = arith.mulf %66, %70 : vector<8x32xf32>
    %72 = arith.addf %68, %71 : vector<8x32xf32>
    %73 = math.tanh %72 : vector<8x32xf32>
    %74 = arith.subf %54, %73 : vector<8x32xf32>
    %75 = arith.mulf %67, %74 : vector<8x32xf32>
    %76 = arith.addf %73, %75 : vector<8x32xf32>
    %c16 = arith.constant 16 : index
    %c0_21 = arith.constant 0 : index
    %77 = vector.load %arg13[%c16, %c0_21] : memref<64x32xf32, #tpu.memory_space<vmem>>, vector<8x32xf32>
    tpu.vector_store %arg13[%c16, %c0_21], %76 {strides = array<i32>} : memref<64x32xf32, #tpu.memory_space<vmem>>, vector<8x32xf32>,
    %78 = vector.extract_strided_slice %9 {offsets = [24, 0], sizes = [8, 96], strides = [1, 1]} : vector<64x96xf32> to vector<8x96xf32>
    %cst_22 = arith.constant dense<0.000000e+00> : vector<8x96xf32>
    %79 = tpu.matmul %76, %2, %cst_22 {dimension_numbers = #tpu.dot_dimension_numbers<[1], [0], [0], [1], [0, 0, 1, 1], [], []>} : vector<8x32xf32>, vector<32x96xf32>, vector<8x96xf32> -> vector<8x96xf32>
    %80 = vector.extract_strided_slice %78 {offsets = [0, 0], sizes = [8, 64], strides = [1, 1]} : vector<8x96xf32> to vector<8x64xf32>
    %81 = vector.extract_strided_slice %79 {offsets = [0, 0], sizes = [8, 64], strides = [1, 1]} : vector<8x96xf32> to vector<8x64xf32>
    %82 = arith.addf %80, %81 : vector<8x64xf32>
    %83 = arith.negf %82 : vector<8x64xf32>
    %84 = math.exp %83 : vector<8x64xf32>
    %cst_23 = arith.constant 1.000000e+00 : f32
    %85 = vector.broadcast %cst_23 : f32 to vector<8x64xf32>
    %86 = arith.addf %85, %84 : vector<8x64xf32>
    %87 = arith.divf %85, %86 : vector<8x64xf32>
    %88 = vector.extract_strided_slice %87 {offsets = [0, 0], sizes = [8, 32], strides = [1, 1]} : vector<8x64xf32> to vector<8x32xf32>
    %89 = vector.extract_strided_slice %87 {offsets = [0, 32], sizes = [8, 32], strides = [1, 1]} : vector<8x64xf32> to vector<8x32xf32>
    %90 = vector.extract_strided_slice %78 {offsets = [0, 64], sizes = [8, 32], strides = [1, 1]} : vector<8x96xf32> to vector<8x32xf32>
    %91 = vector.extract_strided_slice %79 {offsets = [0, 64], sizes = [8, 32], strides = [1, 1]} : vector<8x96xf32> to vector<8x32xf32>
    %92 = arith.addf %91, %5 : vector<8x32xf32>
    %93 = arith.mulf %88, %92 : vector<8x32xf32>
    %94 = arith.addf %90, %93 : vector<8x32xf32>
    %95 = math.tanh %94 : vector<8x32xf32>
    %96 = arith.subf %76, %95 : vector<8x32xf32>
    %97 = arith.mulf %89, %96 : vector<8x32xf32>
    %98 = arith.addf %95, %97 : vector<8x32xf32>
    %c24 = arith.constant 24 : index
    %c0_24 = arith.constant 0 : index
    %99 = vector.load %arg13[%c24, %c0_24] : memref<64x32xf32, #tpu.memory_space<vmem>>, vector<8x32xf32>
    tpu.vector_store %arg13[%c24, %c0_24], %98 {strides = array<i32>} : memref<64x32xf32, #tpu.memory_space<vmem>>, vector<8x32xf32>,
    %100 = vector.extract_strided_slice %9 {offsets = [32, 0], sizes = [8, 96], strides = [1, 1]} : vector<64x96xf32> to vector<8x96xf32>
    %cst_25 = arith.constant dense<0.000000e+00> : vector<8x96xf32>
    %101 = tpu.matmul %98, %2, %cst_25 {dimension_numbers = #tpu.dot_dimension_numbers<[1], [0], [0], [1], [0, 0, 1, 1], [], []>} : vector<8x32xf32>, vector<32x96xf32>, vector<8x96xf32> -> vector<8x96xf32>
    %102 = vector.extract_strided_slice %100 {offsets = [0, 0], sizes = [8, 64], strides = [1, 1]} : vector<8x96xf32> to vector<8x64xf32>
    %103 = vector.extract_strided_slice %101 {offsets = [0, 0], sizes = [8, 64], strides = [1, 1]} : vector<8x96xf32> to vector<8x64xf32>
    %104 = arith.addf %102, %103 : vector<8x64xf32>
    %105 = arith.negf %104 : vector<8x64xf32>
    %106 = math.exp %105 : vector<8x64xf32>
    %cst_26 = arith.constant 1.000000e+00 : f32
    %107 = vector.broadcast %cst_26 : f32 to vector<8x64xf32>
    %108 = arith.addf %107, %106 : vector<8x64xf32>
    %109 = arith.divf %107, %108 : vector<8x64xf32>
    %110 = vector.extract_strided_slice %109 {offsets = [0, 0], sizes = [8, 32], strides = [1, 1]} : vector<8x64xf32> to vector<8x32xf32>
    %111 = vector.extract_strided_slice %109 {offsets = [0, 32], sizes = [8, 32], strides = [1, 1]} : vector<8x64xf32> to vector<8x32xf32>
    %112 = vector.extract_strided_slice %100 {offsets = [0, 64], sizes = [8, 32], strides = [1, 1]} : vector<8x96xf32> to vector<8x32xf32>
    %113 = vector.extract_strided_slice %101 {offsets = [0, 64], sizes = [8, 32], strides = [1, 1]} : vector<8x96xf32> to vector<8x32xf32>
    %114 = arith.addf %113, %5 : vector<8x32xf32>
    %115 = arith.mulf %110, %114 : vector<8x32xf32>
    %116 = arith.addf %112, %115 : vector<8x32xf32>
    %117 = math.tanh %116 : vector<8x32xf32>
    %118 = arith.subf %98, %117 : vector<8x32xf32>
    %119 = arith.mulf %111, %118 : vector<8x32xf32>
    %120 = arith.addf %117, %119 : vector<8x32xf32>
    %c32 = arith.constant 32 : index
    %c0_27 = arith.constant 0 : index
    %121 = vector.load %arg13[%c32, %c0_27] : memref<64x32xf32, #tpu.memory_space<vmem>>, vector<8x32xf32>
    tpu.vector_store %arg13[%c32, %c0_27], %120 {strides = array<i32>} : memref<64x32xf32, #tpu.memory_space<vmem>>, vector<8x32xf32>,
    %122 = vector.extract_strided_slice %9 {offsets = [40, 0], sizes = [8, 96], strides = [1, 1]} : vector<64x96xf32> to vector<8x96xf32>
    %cst_28 = arith.constant dense<0.000000e+00> : vector<8x96xf32>
    %123 = tpu.matmul %120, %2, %cst_28 {dimension_numbers = #tpu.dot_dimension_numbers<[1], [0], [0], [1], [0, 0, 1, 1], [], []>} : vector<8x32xf32>, vector<32x96xf32>, vector<8x96xf32> -> vector<8x96xf32>
    %124 = vector.extract_strided_slice %122 {offsets = [0, 0], sizes = [8, 64], strides = [1, 1]} : vector<8x96xf32> to vector<8x64xf32>
    %125 = vector.extract_strided_slice %123 {offsets = [0, 0], sizes = [8, 64], strides = [1, 1]} : vector<8x96xf32> to vector<8x64xf32>
    %126 = arith.addf %124, %125 : vector<8x64xf32>
    %127 = arith.negf %126 : vector<8x64xf32>
    %128 = math.exp %127 : vector<8x64xf32>
    %cst_29 = arith.constant 1.000000e+00 : f32
    %129 = vector.broadcast %cst_29 : f32 to vector<8x64xf32>
    %130 = arith.addf %129, %128 : vector<8x64xf32>
    %131 = arith.divf %129, %130 : vector<8x64xf32>
    %132 = vector.extract_strided_slice %131 {offsets = [0, 0], sizes = [8, 32], strides = [1, 1]} : vector<8x64xf32> to vector<8x32xf32>
    %133 = vector.extract_strided_slice %131 {offsets = [0, 32], sizes = [8, 32], strides = [1, 1]} : vector<8x64xf32> to vector<8x32xf32>
    %134 = vector.extract_strided_slice %122 {offsets = [0, 64], sizes = [8, 32], strides = [1, 1]} : vector<8x96xf32> to vector<8x32xf32>
    %135 = vector.extract_strided_slice %123 {offsets = [0, 64], sizes = [8, 32], strides = [1, 1]} : vector<8x96xf32> to vector<8x32xf32>
    %136 = arith.addf %135, %5 : vector<8x32xf32>
    %137 = arith.mulf %132, %136 : vector<8x32xf32>
    %138 = arith.addf %134, %137 : vector<8x32xf32>
    %139 = math.tanh %138 : vector<8x32xf32>
    %140 = arith.subf %120, %139 : vector<8x32xf32>
    %141 = arith.mulf %133, %140 : vector<8x32xf32>
    %142 = arith.addf %139, %141 : vector<8x32xf32>
    %c40 = arith.constant 40 : index
    %c0_30 = arith.constant 0 : index
    %143 = vector.load %arg13[%c40, %c0_30] : memref<64x32xf32, #tpu.memory_space<vmem>>, vector<8x32xf32>
    tpu.vector_store %arg13[%c40, %c0_30], %142 {strides = array<i32>} : memref<64x32xf32, #tpu.memory_space<vmem>>, vector<8x32xf32>,
    %144 = vector.extract_strided_slice %9 {offsets = [48, 0], sizes = [8, 96], strides = [1, 1]} : vector<64x96xf32> to vector<8x96xf32>
    %cst_31 = arith.constant dense<0.000000e+00> : vector<8x96xf32>
    %145 = tpu.matmul %142, %2, %cst_31 {dimension_numbers = #tpu.dot_dimension_numbers<[1], [0], [0], [1], [0, 0, 1, 1], [], []>} : vector<8x32xf32>, vector<32x96xf32>, vector<8x96xf32> -> vector<8x96xf32>
    %146 = vector.extract_strided_slice %144 {offsets = [0, 0], sizes = [8, 64], strides = [1, 1]} : vector<8x96xf32> to vector<8x64xf32>
    %147 = vector.extract_strided_slice %145 {offsets = [0, 0], sizes = [8, 64], strides = [1, 1]} : vector<8x96xf32> to vector<8x64xf32>
    %148 = arith.addf %146, %147 : vector<8x64xf32>
    %149 = arith.negf %148 : vector<8x64xf32>
    %150 = math.exp %149 : vector<8x64xf32>
    %cst_32 = arith.constant 1.000000e+00 : f32
    %151 = vector.broadcast %cst_32 : f32 to vector<8x64xf32>
    %152 = arith.addf %151, %150 : vector<8x64xf32>
    %153 = arith.divf %151, %152 : vector<8x64xf32>
    %154 = vector.extract_strided_slice %153 {offsets = [0, 0], sizes = [8, 32], strides = [1, 1]} : vector<8x64xf32> to vector<8x32xf32>
    %155 = vector.extract_strided_slice %153 {offsets = [0, 32], sizes = [8, 32], strides = [1, 1]} : vector<8x64xf32> to vector<8x32xf32>
    %156 = vector.extract_strided_slice %144 {offsets = [0, 64], sizes = [8, 32], strides = [1, 1]} : vector<8x96xf32> to vector<8x32xf32>
    %157 = vector.extract_strided_slice %145 {offsets = [0, 64], sizes = [8, 32], strides = [1, 1]} : vector<8x96xf32> to vector<8x32xf32>
    %158 = arith.addf %157, %5 : vector<8x32xf32>
    %159 = arith.mulf %154, %158 : vector<8x32xf32>
    %160 = arith.addf %156, %159 : vector<8x32xf32>
    %161 = math.tanh %160 : vector<8x32xf32>
    %162 = arith.subf %142, %161 : vector<8x32xf32>
    %163 = arith.mulf %155, %162 : vector<8x32xf32>
    %164 = arith.addf %161, %163 : vector<8x32xf32>
    %c48 = arith.constant 48 : index
    %c0_33 = arith.constant 0 : index
    %165 = vector.load %arg13[%c48, %c0_33] : memref<64x32xf32, #tpu.memory_space<vmem>>, vector<8x32xf32>
    tpu.vector_store %arg13[%c48, %c0_33], %164 {strides = array<i32>} : memref<64x32xf32, #tpu.memory_space<vmem>>, vector<8x32xf32>,
    %166 = vector.extract_strided_slice %9 {offsets = [56, 0], sizes = [8, 96], strides = [1, 1]} : vector<64x96xf32> to vector<8x96xf32>
    %cst_34 = arith.constant dense<0.000000e+00> : vector<8x96xf32>
    %167 = tpu.matmul %164, %2, %cst_34 {dimension_numbers = #tpu.dot_dimension_numbers<[1], [0], [0], [1], [0, 0, 1, 1], [], []>} : vector<8x32xf32>, vector<32x96xf32>, vector<8x96xf32> -> vector<8x96xf32>
    %168 = vector.extract_strided_slice %166 {offsets = [0, 0], sizes = [8, 64], strides = [1, 1]} : vector<8x96xf32> to vector<8x64xf32>
    %169 = vector.extract_strided_slice %167 {offsets = [0, 0], sizes = [8, 64], strides = [1, 1]} : vector<8x96xf32> to vector<8x64xf32>
    %170 = arith.addf %168, %169 : vector<8x64xf32>
    %171 = arith.negf %170 : vector<8x64xf32>
    %172 = math.exp %171 : vector<8x64xf32>
    %cst_35 = arith.constant 1.000000e+00 : f32
    %173 = vector.broadcast %cst_35 : f32 to vector<8x64xf32>
    %174 = arith.addf %173, %172 : vector<8x64xf32>
    %175 = arith.divf %173, %174 : vector<8x64xf32>
    %176 = vector.extract_strided_slice %175 {offsets = [0, 0], sizes = [8, 32], strides = [1, 1]} : vector<8x64xf32> to vector<8x32xf32>
    %177 = vector.extract_strided_slice %175 {offsets = [0, 32], sizes = [8, 32], strides = [1, 1]} : vector<8x64xf32> to vector<8x32xf32>
    %178 = vector.extract_strided_slice %166 {offsets = [0, 64], sizes = [8, 32], strides = [1, 1]} : vector<8x96xf32> to vector<8x32xf32>
    %179 = vector.extract_strided_slice %167 {offsets = [0, 64], sizes = [8, 32], strides = [1, 1]} : vector<8x96xf32> to vector<8x32xf32>
    %180 = arith.addf %179, %5 : vector<8x32xf32>
    %181 = arith.mulf %176, %180 : vector<8x32xf32>
    %182 = arith.addf %178, %181 : vector<8x32xf32>
    %183 = math.tanh %182 : vector<8x32xf32>
    %184 = arith.subf %164, %183 : vector<8x32xf32>
    %185 = arith.mulf %177, %184 : vector<8x32xf32>
    %186 = arith.addf %183, %185 : vector<8x32xf32>
    %c56 = arith.constant 56 : index
    %c0_36 = arith.constant 0 : index
    %187 = vector.load %arg13[%c56, %c0_36] : memref<64x32xf32, #tpu.memory_space<vmem>>, vector<8x32xf32>
    tpu.vector_store %arg13[%c56, %c0_36], %186 {strides = array<i32>} : memref<64x32xf32, #tpu.memory_space<vmem>>, vector<8x32xf32>,
    %c0_37 = arith.constant 0 : index
    %c0_38 = arith.constant 0 : index
    %188 = vector.load %arg13[%c0_37, %c0_38] : memref<64x32xf32, #tpu.memory_space<vmem>>, vector<64x32xf32>
    %c0_39 = arith.constant 0 : index
    %c0_40 = arith.constant 0 : index
    %189 = vector.load %arg6[%c0_39, %c0_40] : memref<32x96xf32, #tpu.memory_space<vmem>>, vector<32x96xf32>
    %c0_41 = arith.constant 0 : index
    %c0_42 = arith.constant 0 : index
    %190 = vector.load %arg7[%c0_41, %c0_42] : memref<32x96xf32, #tpu.memory_space<vmem>>, vector<32x96xf32>
    %c0_43 = arith.constant 0 : index
    %c0_44 = arith.constant 0 : index
    %191 = vector.load %arg9[%c0_43, %c0_44] : memref<1x32xf32, #tpu.memory_space<vmem>>, vector<1x32xf32>
    %192 = vector.shape_cast %191 : vector<1x32xf32> to vector<1x32xf32>
    %193 = vector.broadcast %192 : vector<1x32xf32> to vector<8x32xf32>
    %cst_45 = arith.constant dense<0.000000e+00> : vector<64x96xf32>
    %194 = tpu.matmul %188, %189, %cst_45 {dimension_numbers = #tpu.dot_dimension_numbers<[1], [0], [0], [1], [0, 0, 1, 1], [], []>} : vector<64x32xf32>, vector<32x96xf32>, vector<64x96xf32> -> vector<64x96xf32>
    %c0_46 = arith.constant 0 : index
    %c0_47 = arith.constant 0 : index
    %195 = vector.load %arg8[%c0_46, %c0_47] : memref<1x96xf32, #tpu.memory_space<vmem>>, vector<1x96xf32>
    %196 = vector.broadcast %195 : vector<1x96xf32> to vector<64x96xf32>
    %197 = arith.addf %194, %196 : vector<64x96xf32>
    %c1 = arith.constant 1 : index
    %c0_48 = arith.constant 0 : index
    %c0_49 = arith.constant 0 : index
    %198 = vector.load %arg1[%c1, %c0_48, %c0_49] : memref<2x8x32xf32, #tpu.memory_space<vmem>>, vector<1x8x32xf32>
    %199 = vector.shape_cast %198 : vector<1x8x32xf32> to vector<8x32xf32>
    %200 = vector.extract_strided_slice %197 {offsets = [0, 0], sizes = [8, 96], strides = [1, 1]} : vector<64x96xf32> to vector<8x96xf32>
    %cst_50 = arith.constant dense<0.000000e+00> : vector<8x96xf32>
    %201 = tpu.matmul %199, %190, %cst_50 {dimension_numbers = #tpu.dot_dimension_numbers<[1], [0], [0], [1], [0, 0, 1, 1], [], []>} : vector<8x32xf32>, vector<32x96xf32>, vector<8x96xf32> -> vector<8x96xf32>
    %202 = vector.extract_strided_slice %200 {offsets = [0, 0], sizes = [8, 64], strides = [1, 1]} : vector<8x96xf32> to vector<8x64xf32>
    %203 = vector.extract_strided_slice %201 {offsets = [0, 0], sizes = [8, 64], strides = [1, 1]} : vector<8x96xf32> to vector<8x64xf32>
    %204 = arith.addf %202, %203 : vector<8x64xf32>
    %205 = arith.negf %204 : vector<8x64xf32>
    %206 = math.exp %205 : vector<8x64xf32>
    %cst_51 = arith.constant 1.000000e+00 : f32
    %207 = vector.broadcast %cst_51 : f32 to vector<8x64xf32>
    %208 = arith.addf %207, %206 : vector<8x64xf32>
    %209 = arith.divf %207, %208 : vector<8x64xf32>
    %210 = vector.extract_strided_slice %209 {offsets = [0, 0], sizes = [8, 32], strides = [1, 1]} : vector<8x64xf32> to vector<8x32xf32>
    %211 = vector.extract_strided_slice %209 {offsets = [0, 32], sizes = [8, 32], strides = [1, 1]} : vector<8x64xf32> to vector<8x32xf32>
    %212 = vector.extract_strided_slice %200 {offsets = [0, 64], sizes = [8, 32], strides = [1, 1]} : vector<8x96xf32> to vector<8x32xf32>
    %213 = vector.extract_strided_slice %201 {offsets = [0, 64], sizes = [8, 32], strides = [1, 1]} : vector<8x96xf32> to vector<8x32xf32>
    %214 = arith.addf %213, %193 : vector<8x32xf32>
    %215 = arith.mulf %210, %214 : vector<8x32xf32>
    %216 = arith.addf %212, %215 : vector<8x32xf32>
    %217 = math.tanh %216 : vector<8x32xf32>
    %218 = arith.subf %199, %217 : vector<8x32xf32>
    %219 = arith.mulf %211, %218 : vector<8x32xf32>
    %220 = arith.addf %217, %219 : vector<8x32xf32>
    %221 = vector.extract_strided_slice %197 {offsets = [8, 0], sizes = [8, 96], strides = [1, 1]} : vector<64x96xf32> to vector<8x96xf32>
    %cst_52 = arith.constant dense<0.000000e+00> : vector<8x96xf32>
    %222 = tpu.matmul %220, %190, %cst_52 {dimension_numbers = #tpu.dot_dimension_numbers<[1], [0], [0], [1], [0, 0, 1, 1], [], []>} : vector<8x32xf32>, vector<32x96xf32>, vector<8x96xf32> -> vector<8x96xf32>
    %223 = vector.extract_strided_slice %221 {offsets = [0, 0], sizes = [8, 64], strides = [1, 1]} : vector<8x96xf32> to vector<8x64xf32>
    %224 = vector.extract_strided_slice %222 {offsets = [0, 0], sizes = [8, 64], strides = [1, 1]} : vector<8x96xf32> to vector<8x64xf32>
    %225 = arith.addf %223, %224 : vector<8x64xf32>
    %226 = arith.negf %225 : vector<8x64xf32>
    %227 = math.exp %226 : vector<8x64xf32>
    %cst_53 = arith.constant 1.000000e+00 : f32
    %228 = vector.broadcast %cst_53 : f32 to vector<8x64xf32>
    %229 = arith.addf %228, %227 : vector<8x64xf32>
    %230 = arith.divf %228, %229 : vector<8x64xf32>
    %231 = vector.extract_strided_slice %230 {offsets = [0, 0], sizes = [8, 32], strides = [1, 1]} : vector<8x64xf32> to vector<8x32xf32>
    %232 = vector.extract_strided_slice %230 {offsets = [0, 32], sizes = [8, 32], strides = [1, 1]} : vector<8x64xf32> to vector<8x32xf32>
    %233 = vector.extract_strided_slice %221 {offsets = [0, 64], sizes = [8, 32], strides = [1, 1]} : vector<8x96xf32> to vector<8x32xf32>
    %234 = vector.extract_strided_slice %222 {offsets = [0, 64], sizes = [8, 32], strides = [1, 1]} : vector<8x96xf32> to vector<8x32xf32>
    %235 = arith.addf %234, %193 : vector<8x32xf32>
    %236 = arith.mulf %231, %235 : vector<8x32xf32>
    %237 = arith.addf %233, %236 : vector<8x32xf32>
    %238 = math.tanh %237 : vector<8x32xf32>
    %239 = arith.subf %220, %238 : vector<8x32xf32>
    %240 = arith.mulf %232, %239 : vector<8x32xf32>
    %241 = arith.addf %238, %240 : vector<8x32xf32>
    %242 = vector.extract_strided_slice %197 {offsets = [16, 0], sizes = [8, 96], strides = [1, 1]} : vector<64x96xf32> to vector<8x96xf32>
    %cst_54 = arith.constant dense<0.000000e+00> : vector<8x96xf32>
    %243 = tpu.matmul %241, %190, %cst_54 {dimension_numbers = #tpu.dot_dimension_numbers<[1], [0], [0], [1], [0, 0, 1, 1], [], []>} : vector<8x32xf32>, vector<32x96xf32>, vector<8x96xf32> -> vector<8x96xf32>
    %244 = vector.extract_strided_slice %242 {offsets = [0, 0], sizes = [8, 64], strides = [1, 1]} : vector<8x96xf32> to vector<8x64xf32>
    %245 = vector.extract_strided_slice %243 {offsets = [0, 0], sizes = [8, 64], strides = [1, 1]} : vector<8x96xf32> to vector<8x64xf32>
    %246 = arith.addf %244, %245 : vector<8x64xf32>
    %247 = arith.negf %246 : vector<8x64xf32>
    %248 = math.exp %247 : vector<8x64xf32>
    %cst_55 = arith.constant 1.000000e+00 : f32
    %249 = vector.broadcast %cst_55 : f32 to vector<8x64xf32>
    %250 = arith.addf %249, %248 : vector<8x64xf32>
    %251 = arith.divf %249, %250 : vector<8x64xf32>
    %252 = vector.extract_strided_slice %251 {offsets = [0, 0], sizes = [8, 32], strides = [1, 1]} : vector<8x64xf32> to vector<8x32xf32>
    %253 = vector.extract_strided_slice %251 {offsets = [0, 32], sizes = [8, 32], strides = [1, 1]} : vector<8x64xf32> to vector<8x32xf32>
    %254 = vector.extract_strided_slice %242 {offsets = [0, 64], sizes = [8, 32], strides = [1, 1]} : vector<8x96xf32> to vector<8x32xf32>
    %255 = vector.extract_strided_slice %243 {offsets = [0, 64], sizes = [8, 32], strides = [1, 1]} : vector<8x96xf32> to vector<8x32xf32>
    %256 = arith.addf %255, %193 : vector<8x32xf32>
    %257 = arith.mulf %252, %256 : vector<8x32xf32>
    %258 = arith.addf %254, %257 : vector<8x32xf32>
    %259 = math.tanh %258 : vector<8x32xf32>
    %260 = arith.subf %241, %259 : vector<8x32xf32>
    %261 = arith.mulf %253, %260 : vector<8x32xf32>
    %262 = arith.addf %259, %261 : vector<8x32xf32>
    %263 = vector.extract_strided_slice %197 {offsets = [24, 0], sizes = [8, 96], strides = [1, 1]} : vector<64x96xf32> to vector<8x96xf32>
    %cst_56 = arith.constant dense<0.000000e+00> : vector<8x96xf32>
    %264 = tpu.matmul %262, %190, %cst_56 {dimension_numbers = #tpu.dot_dimension_numbers<[1], [0], [0], [1], [0, 0, 1, 1], [], []>} : vector<8x32xf32>, vector<32x96xf32>, vector<8x96xf32> -> vector<8x96xf32>
    %265 = vector.extract_strided_slice %263 {offsets = [0, 0], sizes = [8, 64], strides = [1, 1]} : vector<8x96xf32> to vector<8x64xf32>
    %266 = vector.extract_strided_slice %264 {offsets = [0, 0], sizes = [8, 64], strides = [1, 1]} : vector<8x96xf32> to vector<8x64xf32>
    %267 = arith.addf %265, %266 : vector<8x64xf32>
    %268 = arith.negf %267 : vector<8x64xf32>
    %269 = math.exp %268 : vector<8x64xf32>
    %cst_57 = arith.constant 1.000000e+00 : f32
    %270 = vector.broadcast %cst_57 : f32 to vector<8x64xf32>
    %271 = arith.addf %270, %269 : vector<8x64xf32>
    %272 = arith.divf %270, %271 : vector<8x64xf32>
    %273 = vector.extract_strided_slice %272 {offsets = [0, 0], sizes = [8, 32], strides = [1, 1]} : vector<8x64xf32> to vector<8x32xf32>
    %274 = vector.extract_strided_slice %272 {offsets = [0, 32], sizes = [8, 32], strides = [1, 1]} : vector<8x64xf32> to vector<8x32xf32>
    %275 = vector.extract_strided_slice %263 {offsets = [0, 64], sizes = [8, 32], strides = [1, 1]} : vector<8x96xf32> to vector<8x32xf32>
    %276 = vector.extract_strided_slice %264 {offsets = [0, 64], sizes = [8, 32], strides = [1, 1]} : vector<8x96xf32> to vector<8x32xf32>
    %277 = arith.addf %276, %193 : vector<8x32xf32>
    %278 = arith.mulf %273, %277 : vector<8x32xf32>
    %279 = arith.addf %275, %278 : vector<8x32xf32>
    %280 = math.tanh %279 : vector<8x32xf32>
    %281 = arith.subf %262, %280 : vector<8x32xf32>
    %282 = arith.mulf %274, %281 : vector<8x32xf32>
    %283 = arith.addf %280, %282 : vector<8x32xf32>
    %284 = vector.extract_strided_slice %197 {offsets = [32, 0], sizes = [8, 96], strides = [1, 1]} : vector<64x96xf32> to vector<8x96xf32>
    %cst_58 = arith.constant dense<0.000000e+00> : vector<8x96xf32>
    %285 = tpu.matmul %283, %190, %cst_58 {dimension_numbers = #tpu.dot_dimension_numbers<[1], [0], [0], [1], [0, 0, 1, 1], [], []>} : vector<8x32xf32>, vector<32x96xf32>, vector<8x96xf32> -> vector<8x96xf32>
    %286 = vector.extract_strided_slice %284 {offsets = [0, 0], sizes = [8, 64], strides = [1, 1]} : vector<8x96xf32> to vector<8x64xf32>
    %287 = vector.extract_strided_slice %285 {offsets = [0, 0], sizes = [8, 64], strides = [1, 1]} : vector<8x96xf32> to vector<8x64xf32>
    %288 = arith.addf %286, %287 : vector<8x64xf32>
    %289 = arith.negf %288 : vector<8x64xf32>
    %290 = math.exp %289 : vector<8x64xf32>
    %cst_59 = arith.constant 1.000000e+00 : f32
    %291 = vector.broadcast %cst_59 : f32 to vector<8x64xf32>
    %292 = arith.addf %291, %290 : vector<8x64xf32>
    %293 = arith.divf %291, %292 : vector<8x64xf32>
    %294 = vector.extract_strided_slice %293 {offsets = [0, 0], sizes = [8, 32], strides = [1, 1]} : vector<8x64xf32> to vector<8x32xf32>
    %295 = vector.extract_strided_slice %293 {offsets = [0, 32], sizes = [8, 32], strides = [1, 1]} : vector<8x64xf32> to vector<8x32xf32>
    %296 = vector.extract_strided_slice %284 {offsets = [0, 64], sizes = [8, 32], strides = [1, 1]} : vector<8x96xf32> to vector<8x32xf32>
    %297 = vector.extract_strided_slice %285 {offsets = [0, 64], sizes = [8, 32], strides = [1, 1]} : vector<8x96xf32> to vector<8x32xf32>
    %298 = arith.addf %297, %193 : vector<8x32xf32>
    %299 = arith.mulf %294, %298 : vector<8x32xf32>
    %300 = arith.addf %296, %299 : vector<8x32xf32>
    %301 = math.tanh %300 : vector<8x32xf32>
    %302 = arith.subf %283, %301 : vector<8x32xf32>
    %303 = arith.mulf %295, %302 : vector<8x32xf32>
    %304 = arith.addf %301, %303 : vector<8x32xf32>
    %305 = vector.extract_strided_slice %197 {offsets = [40, 0], sizes = [8, 96], strides = [1, 1]} : vector<64x96xf32> to vector<8x96xf32>
    %cst_60 = arith.constant dense<0.000000e+00> : vector<8x96xf32>
    %306 = tpu.matmul %304, %190, %cst_60 {dimension_numbers = #tpu.dot_dimension_numbers<[1], [0], [0], [1], [0, 0, 1, 1], [], []>} : vector<8x32xf32>, vector<32x96xf32>, vector<8x96xf32> -> vector<8x96xf32>
    %307 = vector.extract_strided_slice %305 {offsets = [0, 0], sizes = [8, 64], strides = [1, 1]} : vector<8x96xf32> to vector<8x64xf32>
    %308 = vector.extract_strided_slice %306 {offsets = [0, 0], sizes = [8, 64], strides = [1, 1]} : vector<8x96xf32> to vector<8x64xf32>
    %309 = arith.addf %307, %308 : vector<8x64xf32>
    %310 = arith.negf %309 : vector<8x64xf32>
    %311 = math.exp %310 : vector<8x64xf32>
    %cst_61 = arith.constant 1.000000e+00 : f32
    %312 = vector.broadcast %cst_61 : f32 to vector<8x64xf32>
    %313 = arith.addf %312, %311 : vector<8x64xf32>
    %314 = arith.divf %312, %313 : vector<8x64xf32>
    %315 = vector.extract_strided_slice %314 {offsets = [0, 0], sizes = [8, 32], strides = [1, 1]} : vector<8x64xf32> to vector<8x32xf32>
    %316 = vector.extract_strided_slice %314 {offsets = [0, 32], sizes = [8, 32], strides = [1, 1]} : vector<8x64xf32> to vector<8x32xf32>
    %317 = vector.extract_strided_slice %305 {offsets = [0, 64], sizes = [8, 32], strides = [1, 1]} : vector<8x96xf32> to vector<8x32xf32>
    %318 = vector.extract_strided_slice %306 {offsets = [0, 64], sizes = [8, 32], strides = [1, 1]} : vector<8x96xf32> to vector<8x32xf32>
    %319 = arith.addf %318, %193 : vector<8x32xf32>
    %320 = arith.mulf %315, %319 : vector<8x32xf32>
    %321 = arith.addf %317, %320 : vector<8x32xf32>
    %322 = math.tanh %321 : vector<8x32xf32>
    %323 = arith.subf %304, %322 : vector<8x32xf32>
    %324 = arith.mulf %316, %323 : vector<8x32xf32>
    %325 = arith.addf %322, %324 : vector<8x32xf32>
    %326 = vector.extract_strided_slice %197 {offsets = [48, 0], sizes = [8, 96], strides = [1, 1]} : vector<64x96xf32> to vector<8x96xf32>
    %cst_62 = arith.constant dense<0.000000e+00> : vector<8x96xf32>
    %327 = tpu.matmul %325, %190, %cst_62 {dimension_numbers = #tpu.dot_dimension_numbers<[1], [0], [0], [1], [0, 0, 1, 1], [], []>} : vector<8x32xf32>, vector<32x96xf32>, vector<8x96xf32> -> vector<8x96xf32>
    %328 = vector.extract_strided_slice %326 {offsets = [0, 0], sizes = [8, 64], strides = [1, 1]} : vector<8x96xf32> to vector<8x64xf32>
    %329 = vector.extract_strided_slice %327 {offsets = [0, 0], sizes = [8, 64], strides = [1, 1]} : vector<8x96xf32> to vector<8x64xf32>
    %330 = arith.addf %328, %329 : vector<8x64xf32>
    %331 = arith.negf %330 : vector<8x64xf32>
    %332 = math.exp %331 : vector<8x64xf32>
    %cst_63 = arith.constant 1.000000e+00 : f32
    %333 = vector.broadcast %cst_63 : f32 to vector<8x64xf32>
    %334 = arith.addf %333, %332 : vector<8x64xf32>
    %335 = arith.divf %333, %334 : vector<8x64xf32>
    %336 = vector.extract_strided_slice %335 {offsets = [0, 0], sizes = [8, 32], strides = [1, 1]} : vector<8x64xf32> to vector<8x32xf32>
    %337 = vector.extract_strided_slice %335 {offsets = [0, 32], sizes = [8, 32], strides = [1, 1]} : vector<8x64xf32> to vector<8x32xf32>
    %338 = vector.extract_strided_slice %326 {offsets = [0, 64], sizes = [8, 32], strides = [1, 1]} : vector<8x96xf32> to vector<8x32xf32>
    %339 = vector.extract_strided_slice %327 {offsets = [0, 64], sizes = [8, 32], strides = [1, 1]} : vector<8x96xf32> to vector<8x32xf32>
    %340 = arith.addf %339, %193 : vector<8x32xf32>
    %341 = arith.mulf %336, %340 : vector<8x32xf32>
    %342 = arith.addf %338, %341 : vector<8x32xf32>
    %343 = math.tanh %342 : vector<8x32xf32>
    %344 = arith.subf %325, %343 : vector<8x32xf32>
    %345 = arith.mulf %337, %344 : vector<8x32xf32>
    %346 = arith.addf %343, %345 : vector<8x32xf32>
    %347 = vector.extract_strided_slice %197 {offsets = [56, 0], sizes = [8, 96], strides = [1, 1]} : vector<64x96xf32> to vector<8x96xf32>
    %cst_64 = arith.constant dense<0.000000e+00> : vector<8x96xf32>
    %348 = tpu.matmul %346, %190, %cst_64 {dimension_numbers = #tpu.dot_dimension_numbers<[1], [0], [0], [1], [0, 0, 1, 1], [], []>} : vector<8x32xf32>, vector<32x96xf32>, vector<8x96xf32> -> vector<8x96xf32>
    %349 = vector.extract_strided_slice %347 {offsets = [0, 0], sizes = [8, 64], strides = [1, 1]} : vector<8x96xf32> to vector<8x64xf32>
    %350 = vector.extract_strided_slice %348 {offsets = [0, 0], sizes = [8, 64], strides = [1, 1]} : vector<8x96xf32> to vector<8x64xf32>
    %351 = arith.addf %349, %350 : vector<8x64xf32>
    %352 = arith.negf %351 : vector<8x64xf32>
    %353 = math.exp %352 : vector<8x64xf32>
    %cst_65 = arith.constant 1.000000e+00 : f32
    %354 = vector.broadcast %cst_65 : f32 to vector<8x64xf32>
    %355 = arith.addf %354, %353 : vector<8x64xf32>
    %356 = arith.divf %354, %355 : vector<8x64xf32>
    %357 = vector.extract_strided_slice %356 {offsets = [0, 0], sizes = [8, 32], strides = [1, 1]} : vector<8x64xf32> to vector<8x32xf32>
    %358 = vector.extract_strided_slice %356 {offsets = [0, 32], sizes = [8, 32], strides = [1, 1]} : vector<8x64xf32> to vector<8x32xf32>
    %359 = vector.extract_strided_slice %347 {offsets = [0, 64], sizes = [8, 32], strides = [1, 1]} : vector<8x96xf32> to vector<8x32xf32>
    %360 = vector.extract_strided_slice %348 {offsets = [0, 64], sizes = [8, 32], strides = [1, 1]} : vector<8x96xf32> to vector<8x32xf32>
    %361 = arith.addf %360, %193 : vector<8x32xf32>
    %362 = arith.mulf %357, %361 : vector<8x32xf32>
    %363 = arith.addf %359, %362 : vector<8x32xf32>
    %364 = math.tanh %363 : vector<8x32xf32>
    %365 = arith.subf %346, %364 : vector<8x32xf32>
    %366 = arith.mulf %358, %365 : vector<8x32xf32>
    %367 = arith.addf %364, %366 : vector<8x32xf32>
    %c0_66 = arith.constant 0 : index
    %c0_67 = arith.constant 0 : index
    %368 = vector.load %arg10[%c0_66, %c0_67] : memref<32x3xf32, #tpu.memory_space<vmem>>, vector<32x3xf32>
    %cst_68 = arith.constant dense<0.000000e+00> : vector<8x3xf32>
    %369 = tpu.matmul %367, %368, %cst_68 {dimension_numbers = #tpu.dot_dimension_numbers<[1], [0], [0], [1], [0, 0, 1, 1], [], []>} : vector<8x32xf32>, vector<32x3xf32>, vector<8x3xf32> -> vector<8x3xf32>
    %c0_69 = arith.constant 0 : index
    %c0_70 = arith.constant 0 : index
    %370 = vector.load %arg11[%c0_69, %c0_70] : memref<1x3xf32, #tpu.memory_space<vmem>>, vector<1x3xf32>
    %371 = vector.broadcast %370 : vector<1x3xf32> to vector<8x3xf32>
    %372 = arith.addf %369, %371 : vector<8x3xf32>
    %cst_71 = arith.constant 2.000000e+01 : f32
    %373 = vector.broadcast %cst_71 : f32 to vector<8x3xf32>
    %374 = arith.cmpf ogt, %372, %373 : vector<8x3xf32>
    %cst_72 = arith.constant 2.000000e+01 : f32
    %375 = vector.broadcast %cst_72 : f32 to vector<8x3xf32>
    %376 = arith.minimumf %372, %375 : vector<8x3xf32>
    %377 = math.exp %376 : vector<8x3xf32>
    %378 = math.log1p %377 : vector<8x3xf32>
    %379 = arith.select %374, %372, %378 : vector<8x3xi1>, vector<8x3xf32>
    %c0_73 = arith.constant 0 : index
    %c0_74 = arith.constant 0 : index
    %380 = vector.load %arg12[%c0_73, %c0_74] : memref<8x3xf32, #tpu.memory_space<vmem>>, vector<8x3xf32>
    tpu.vector_store %arg12[%c0_73, %c0_74], %379 {strides = array<i32>} : memref<8x3xf32, #tpu.memory_space<vmem>>, vector<8x3xf32>,
    return
  }
}

</mosaic_0001>

<llo_original>
// kernel: tpu_custom_call.1
$region0: #{tpu_custom_call.1}
  #allocation0 [shape = 'u32[]', space=smem, size = 0x4, offset = 0x4, fixed_abs, tag = 'smem constant byte address 0x4 - core index']
  #allocation1 [shape = 'u32[72,128]{1,0:T(1,128)}', space=vmem, size = 0x9000, scoped, tag = 'internal scratch']
  #allocation2 [shape = 'f32[64,32]{1,0:T(8,128)}', space=vmem, size = 0x8000, scoped, tag = 'scratch operand']
  %s0 = inlined_call_operand.vmem [shape: f32[64,4], index: 0, kind: input, shape index: {}]
  %s1 = inlined_call_operand.hbm [shape: f32[2,8,32], index: 1, kind: input, shape index: {}]
  %s2 = inlined_call_operand.vmem [shape: f32[4,96], index: 2, kind: input, shape index: {}]
  %s3 = inlined_call_operand.vmem [shape: f32[32,96], index: 3, kind: input, shape index: {}]
  %s4 = inlined_call_operand.vmem [shape: f32[1,96], index: 4, kind: input, shape index: {}]
  %s5 = inlined_call_operand.vmem [shape: f32[1,32], index: 5, kind: input, shape index: {}]
  %s6 = inlined_call_operand.vmem [shape: f32[32,96], index: 6, kind: input, shape index: {}]
  %s7 = inlined_call_operand.vmem [shape: f32[32,96], index: 7, kind: input, shape index: {}]
  %s8 = inlined_call_operand.vmem [shape: f32[1,96], index: 8, kind: input, shape index: {}]
  %s9 = inlined_call_operand.hbm [shape: f32[1,32], index: 9, kind: input, shape index: {}]
  %s10 = inlined_call_operand.vmem [shape: f32[32,3], index: 10, kind: input, shape index: {}]
  %s11 = inlined_call_operand.vmem [shape: f32[1,3], index: 11, kind: input, shape index: {}]
  %s12 = inlined_call_operand.vmem [shape: f32[8,3], index: 12, kind: output, shape index: {}]
  %s13 = sld [smem:[#allocation0]]
  $region66: #{tpu_custom_call.1} parent=0
    _
  %s15 = ssub.s32 1, %s13
  %s16 = scalar_select 0, %s15, %s13
  $region1: #{tpu_custom_call.1} parent=0
    #allocation3 [shape = 'u8[8192]{0}', space=vmem, size = 0x2000, scoped, tag = 'input window, operand 1, single buffered']
    #allocation4 [shape = 's32[1]{0}', space=sflag, size = 0x4, scoped, tag = 'scoped memory for tpu_custom_call.1']
    #allocation5 [shape = 'u8[512]{0}', space=vmem, size = 0x400, scoped, tag = 'input window, operand 9, single buffered']
    #allocation6 [shape = 's32[1]{0}', space=sflag, size = 0x4, scoped, tag = 'scoped memory for tpu_custom_call.1']
    %17 = vsyncpa [#allocation4], 0
    %18 = vsyncpa [#allocation6], 0
    // Predicated region
    $region2: #{tpu_custom_call.1} parent=1 // pred_check
      _
    $region3: #{tpu_custom_call.1} parent=1 // pred_check_branch
      %20 = sbr.rel (0) target = $region5
    $region4: #{tpu_custom_call.1} parent=1 // pred_region
      _
    $region5: #{tpu_custom_call.1} parent=1 // pred_fallthru
      _
    // Predicated region
    $region6: #{tpu_custom_call.1} parent=1 // pred_check
      _
    $region7: #{tpu_custom_call.1} parent=1 // pred_check_branch
      %22 = sbr.rel (0) target = $region9
    $region8: #{tpu_custom_call.1} parent=1 // pred_region
      %24 = vsyncadd [#allocation4], 0
      %s25 = sshll.u32 %s1, 4
      %s26 = int_to_ptr.hbm [resolvable:$true] %s25
      %s27 = sshll.u32 [#allocation3], 4
      %s28 = int_to_ptr.vmem [resolvable:$true] %s27
      %33 = dma.hbm_to_vmem [thread:$0]  %s26, 256, %s28, [#allocation4], 128, 128, 8
    $region9: #{tpu_custom_call.1} parent=1 // pred_fallthru
      _
    // Predicated region
    $region10: #{tpu_custom_call.1} parent=1 // pred_check
      _
    $region11: #{tpu_custom_call.1} parent=1 // pred_check_branch
      %35 = sbr.rel (0) target = $region13
    $region12: #{tpu_custom_call.1} parent=1 // pred_region
      _
    $region13: #{tpu_custom_call.1} parent=1 // pred_fallthru
      _
    // Predicated region
    $region14: #{tpu_custom_call.1} parent=1 // pred_check
      _
    $region15: #{tpu_custom_call.1} parent=1 // pred_check_branch
      %37 = sbr.rel (0) target = $region17
    $region16: #{tpu_custom_call.1} parent=1 // pred_region
      _
    $region17: #{tpu_custom_call.1} parent=1 // pred_fallthru
      _
    // Predicated region
    $region18: #{tpu_custom_call.1} parent=1 // pred_check
      _
    $region19: #{tpu_custom_call.1} parent=1 // pred_check_branch
      %39 = sbr.rel (0) target = $region21
    $region20: #{tpu_custom_call.1} parent=1 // pred_region
      _
    $region21: #{tpu_custom_call.1} parent=1 // pred_fallthru
      _
    // Predicated region
    $region22: #{tpu_custom_call.1} parent=1 // pred_check
      _
    $region23: #{tpu_custom_call.1} parent=1 // pred_check_branch
      %41 = sbr.rel (0) target = $region25
    $region24: #{tpu_custom_call.1} parent=1 // pred_region
      _
    $region25: #{tpu_custom_call.1} parent=1 // pred_fallthru
      _
    // Predicated region
    $region26: #{tpu_custom_call.1} parent=1 // pred_check
      _
    $region27: #{tpu_custom_call.1} parent=1 // pred_check_branch
      %43 = sbr.rel (0) target = $region29
    $region28: #{tpu_custom_call.1} parent=1 // pred_region
      _
    $region29: #{tpu_custom_call.1} parent=1 // pred_fallthru
      _
    // Predicated region
    $region30: #{tpu_custom_call.1} parent=1 // pred_check
      _
    $region31: #{tpu_custom_call.1} parent=1 // pred_check_branch
      %45 = sbr.rel (0) target = $region33
    $region32: #{tpu_custom_call.1} parent=1 // pred_region
      _
    $region33: #{tpu_custom_call.1} parent=1 // pred_fallthru
      _
    // Predicated region
    $region34: #{tpu_custom_call.1} parent=1 // pred_check
      _
    $region35: #{tpu_custom_call.1} parent=1 // pred_check_branch
      %47 = sbr.rel (0) target = $region37
    $region36: #{tpu_custom_call.1} parent=1 // pred_region
      _
    $region37: #{tpu_custom_call.1} parent=1 // pred_fallthru
      _
    // Predicated region
    $region38: #{tpu_custom_call.1} parent=1 // pred_check
      _
    $region39: #{tpu_custom_call.1} parent=1 // pred_check_branch
      %49 = sbr.rel (0) target = $region41
    $region40: #{tpu_custom_call.1} parent=1 // pred_region
      %51 = vsyncadd [#allocation6], 0
      %s53 = sshll.u32 %s9, 4
      %s54 = int_to_ptr.hbm [resolvable:$true] %s53
      %s55 = sshll.u32 [#allocation5], 4
      %s56 = int_to_ptr.vmem [resolvable:$true] %s55
      %58 = dma.hbm_to_vmem [thread:$0]  %s54, 16, %s56, [#allocation6]
    $region41: #{tpu_custom_call.1} parent=1 // pred_fallthru
      _
    // Predicated region
    $region42: #{tpu_custom_call.1} parent=1 // pred_check
      _
    $region43: #{tpu_custom_call.1} parent=1 // pred_check_branch
      %60 = sbr.rel (0) target = $region45
    $region44: #{tpu_custom_call.1} parent=1 // pred_region
      _
    $region45: #{tpu_custom_call.1} parent=1 // pred_fallthru
      _
    // Predicated region
    $region46: #{tpu_custom_call.1} parent=1 // pred_check
      _
    $region47: #{tpu_custom_call.1} parent=1 // pred_check_branch
      %62 = sbr.rel (0) target = $region49
    $region48: #{tpu_custom_call.1} parent=1 // pred_region
      _
    $region49: #{tpu_custom_call.1} parent=1 // pred_fallthru
      _
    // Predicated region
    $region50: #{tpu_custom_call.1} parent=1 // pred_check
      _
    $region51: #{tpu_custom_call.1} parent=1 // pred_check_branch
      %64 = sbr.rel (0) target = $region53
    $region52: #{tpu_custom_call.1} parent=1 // pred_region
      %66 = dma.done [#allocation4], 256
    $region53: #{tpu_custom_call.1} parent=1 // pred_fallthru
      _
    // Predicated region
    $region54: #{tpu_custom_call.1} parent=1 // pred_check
      _
    $region55: #{tpu_custom_call.1} parent=1 // pred_check_branch
      %68 = sbr.rel (0) target = $region57
    $region56: #{tpu_custom_call.1} parent=1 // pred_region
      %70 = dma.done [#allocation6], 16
    $region57: #{tpu_custom_call.1} parent=1 // pred_fallthru
      _
    %v71 = vld [vmem:[%s0] sm:$0xff]
    %v72 = vld [vmem:[%s0 + $0x8] sm:$0xff]
    %v73 = vld [vmem:[%s0 + $0x10] sm:$0xff]
    %v74 = vld [vmem:[%s0 + $0x18] sm:$0xff]
    %v75 = vld [vmem:[%s0 + $0x20] sm:$0xff]
    %v76 = vld [vmem:[%s0 + $0x28] sm:$0xff]
    %v77 = vld [vmem:[%s0 + $0x30] sm:$0xff]
    %v78 = vld [vmem:[%s0 + $0x38] sm:$0xff]
    %v79 = vld [vmem:[%s2] sm:$0xf]
    %v80 = vld [vmem:[%s3] sm:$0xff]
    %v81 = vld [vmem:[%s3 + $0x8] sm:$0xff]
    %v82 = vld [vmem:[%s3 + $0x10] sm:$0xff]
    %v83 = vld [vmem:[%s3 + $0x18] sm:$0xff]
    %v84 = vld [vmem:[%s5] sm:$0x1]
    %v86 = vperm.slane %v84, 0
    %v87 = vld [vmem:[%s4] sm:$0x1]
    %v89 = vperm.slane %v87, 0
    %vm91 = vcmask 31744
    %v93 = vsel %vm91, %v71, 0
    %v96 = vsel %vm91, %v72, 0
    %v99 = vsel %vm91, %v73, 0
    %v102 = vsel %vm91, %v74, 0
    %v105 = vsel %vm91, %v75, 0
    %v108 = vsel %vm91, %v76, 0
    %v111 = vsel %vm91, %v77, 0
    %v114 = vsel %vm91, %v78, 0
    %vm116 = vcmask 1043456
    %v118 = vsel %vm116, %v79, 0
    %120 = vmatpush.msra.mxu0 0.0
    %121 = vmatpush.msra.mxu0 0.0
    %122 = vmatpush.msra.mxu0 0.0
    %123 = vmatpush.msra.mxu0 0.0
    %124 = vmatpush.msra.mxu0 0.0
    %125 = vmatpush.msra.mxu0 0.0
    %126 = vmatpush.msra.mxu0 0.0
    %127 = vmatpush.msra.mxu0 0.0
    %128 = vmatpush.msra.mxu0 0.0
    %129 = vmatpush.msra.mxu0 0.0
    %130 = vmatpush.msra.mxu0 0.0
    %131 = vmatpush.msra.mxu0 0.0
    %132 = vmatpush.msra.mxu0 0.0
    %133 = vmatpush.msra.mxu0 0.0
    %134 = vmatpush.msra.mxu0 0.0
    %135 = vmatpush.msra.mxu0 %v118
    %136 = vmatmul.f32.gmra.mxu0 %v93
    %v137 = vpop.f32.mrf.mxu0
    %v138 = vadd.f32 %v89, %v137
    %139 = vmatmul.f32.gmra.mxu0 %v96
    %v140 = vpop.f32.mrf.mxu0
    %v141 = vadd.f32 %v89, %v140
    %142 = vmatmul.f32.gmra.mxu0 %v99
    %v143 = vpop.f32.mrf.mxu0
    %v144 = vadd.f32 %v89, %v143
    %145 = vmatmul.f32.gmra.mxu0 %v102
    %v146 = vpop.f32.mrf.mxu0
    %v147 = vadd.f32 %v89, %v146
    %148 = vmatmul.f32.gmra.mxu0 %v105
    %v149 = vpop.f32.mrf.mxu0
    %v150 = vadd.f32 %v89, %v149
    %151 = vmatmul.f32.gmra.mxu0 %v108
    %v152 = vpop.f32.mrf.mxu0
    %v153 = vadd.f32 %v89, %v152
    %154 = vmatmul.f32.gmra.mxu0 %v111
    %v155 = vpop.f32.mrf.mxu0
    %v156 = vadd.f32 %v89, %v155
    %157 = vmatmul.f32.gmra.mxu0 %v114
    %v158 = vpop.f32.mrf.mxu0
    %v159 = vadd.f32 %v89, %v158
    %160 = vdwg.mxu0
    %v161 = vld [vmem:[#allocation3] sm:$0xff]
    %vm162 = vcmask 261120
    %v164 = vsel %vm162, %v161, 0
    %166 = vmatpush.msra.mxu0 0.0
    %167 = vmatpush.msra.mxu0 0.0
    %168 = vmatpush.msra.mxu0 0.0
    %169 = vmatpush.msra.mxu0 0.0
    %170 = vmatpush.msra.mxu0 0.0
    %171 = vmatpush.msra.mxu0 0.0
    %172 = vmatpush.msra.mxu0 0.0
    %173 = vmatpush.msra.mxu0 0.0
    %174 = vmatpush.msra.mxu0 0.0
    %175 = vmatpush.msra.mxu0 0.0
    %176 = vmatpush.msra.mxu0 0.0
    %177 = vmatpush.msra.mxu0 0.0
    %178 = vmatpush.msra.mxu0 %v83
    %179 = vmatpush.msra.mxu0 %v82
    %180 = vmatpush.msra.mxu0 %v81
    %181 = vmatpush.msra.mxu0 %v80
    %182 = vmatmul.f32.gmra.mxu0 %v164
    %v183 = vpop.f32.mrf.mxu0
    %v184 = vadd.f32 0.0, %v183
    %185 = vdwg.mxu0
    %v186 = vadd.f32 %v138, %v184
    %v187 = vxor.u32 %v186, 2147483648
    %v188 = vmul.f32 %v187, 1.442695
    %v189 = vpow.pop %v188
    %v190 = vadd.f32 %v189, 1.0
    %v191 = vrcp.pop %v190
    %v192 = vmul.f32 %v190, %v191
    %v193 = vsub.f32 1.0, %v192
    %v194 = vmul.f32 %v191, %v193
    %v195 = vadd.f32 %v191, %v194
    %vm196 = vweird.f32 %v190
    %vm197 = vweird.f32 %v191
    %vm198 = vmor %vm196, %vm197
    %v199 = vsel %vm198, %v191, %v195
    %v200 = vand.u32 2147483647, %v190
    %vm201 = vcmp.eq.f32.partialorder %v200, 8.507059e+37
    %v202 = vand.u32 %v190, 2147483648
    %v203 = vor.u32 1.1754944e-38, %v202
    %v204 = vsel %vm201, %v203, %v199
    %v205 = vmul.f32 1.0, %v204
    %206 = vrot.lane.b32.xlu0 %v86, 64
    %v207 = vpop.permute.xlu0 %206
    %v209 = vadd.f32 %v184, %v207
    %211 = vrot.lane.b32.xlu0 %v209, 64
    %v212 = vpop.permute.xlu0 %211
    %v214 = vmul.f32 %v205, %v212
    %216 = vrot.lane.b32.xlu0 %v214, 64
    %v217 = vpop.permute.xlu0 %216
    %v219 = vadd.f32 %v138, %v217
    %v220 = vtanh.pop %v219
    %222 = vrot.lane.b32.xlu0 %v220, 64
    %v223 = vpop.permute.xlu0 %222
    %v225 = vsub.f32 %v161, %v223
    %227 = vrot.lane.b32.xlu0 %v225, 32
    %v228 = vpop.permute.xlu0 %227
    %v230 = vmul.f32 %v205, %v228
    %232 = vrot.lane.b32.xlu0 %v230, 32
    %v233 = vpop.permute.xlu0 %232
    %v235 = vadd.f32 %v220, %v233
    %237 = vrot.lane.b32.xlu0 %v235, 64
    %v238 = vpop.permute.xlu0 %237
    %240 = vst.msk [vmem:[#allocation2] sm:$0xff] %vm162, %v238
    %v241 = vsel %vm162, %v238, 0
    %243 = vmatpush.msra.mxu0 0.0
    %244 = vmatpush.msra.mxu0 0.0
    %245 = vmatpush.msra.mxu0 0.0
    %246 = vmatpush.msra.mxu0 0.0
    %247 = vmatpush.msra.mxu0 0.0
    %248 = vmatpush.msra.mxu0 0.0
    %249 = vmatpush.msra.mxu0 0.0
    %250 = vmatpush.msra.mxu0 0.0
    %251 = vmatpush.msra.mxu0 0.0
    %252 = vmatpush.msra.mxu0 0.0
    %253 = vmatpush.msra.mxu0 0.0
    %254 = vmatpush.msra.mxu0 0.0
    %255 = vmatpush.msra.mxu0 %v83
    %256 = vmatpush.msra.mxu0 %v82
    %257 = vmatpush.msra.mxu0 %v81
    %258 = vmatpush.msra.mxu0 %v80
    %259 = vmatmul.f32.gmra.mxu0 %v241
    %v260 = vpop.f32.mrf.mxu0
    %v261 = vadd.f32 0.0, %v260
    %262 = vdwg.mxu0
    %v263 = vadd.f32 %v141, %v261
    %v264 = vxor.u32 %v263, 2147483648
    %v265 = vmul.f32 %v264, 1.442695
    %v266 = vpow.pop %v265
    %v267 = vadd.f32 %v266, 1.0
    %v268 = vrcp.pop %v267
    %v269 = vmul.f32 %v267, %v268
    %v270 = vsub.f32 1.0, %v269
    %v271 = vmul.f32 %v268, %v270
    %v272 = vadd.f32 %v268, %v271
    %vm273 = vweird.f32 %v267
    %vm274 = vweird.f32 %v268
    %vm275 = vmor %vm273, %vm274
    %v276 = vsel %vm275, %v268, %v272
    %v277 = vand.u32 2147483647, %v267
    %vm278 = vcmp.eq.f32.partialorder %v277, 8.507059e+37
    %v279 = vand.u32 %v267, 2147483648
    %v280 = vor.u32 1.1754944e-38, %v279
    %v281 = vsel %vm278, %v280, %v276
    %v282 = vmul.f32 1.0, %v281
    %v283 = vadd.f32 %v261, %v207
    %285 = vrot.lane.b32.xlu0 %v283, 64
    %v286 = vpop.permute.xlu0 %285
    %v288 = vmul.f32 %v282, %v286
    %290 = vrot.lane.b32.xlu0 %v288, 64
    %v291 = vpop.permute.xlu0 %290
    %v293 = vadd.f32 %v141, %v291
    %v294 = vtanh.pop %v293
    %v295 = vsub.f32 %v235, %v294
    %297 = vrot.lane.b32.xlu0 %v295, 96
    %v298 = vpop.permute.xlu0 %297
    %v300 = vmul.f32 %v282, %v298
    %302 = vrot.lane.b32.xlu0 %v300, 32
    %v303 = vpop.permute.xlu0 %302
    %v305 = vadd.f32 %v294, %v303
    %307 = vrot.lane.b32.xlu0 %v305, 64
    %v308 = vpop.permute.xlu0 %307
    %310 = vst.msk [vmem:[#allocation2 + $0x8] sm:$0xff] %vm162, %v308
    %v311 = vsel %vm162, %v308, 0
    %313 = vmatpush.msra.mxu0 0.0
    %314 = vmatpush.msra.mxu0 0.0
    %315 = vmatpush.msra.mxu0 0.0
    %316 = vmatpush.msra.mxu0 0.0
    %317 = vmatpush.msra.mxu0 0.0
    %318 = vmatpush.msra.mxu0 0.0
    %319 = vmatpush.msra.mxu0 0.0
    %320 = vmatpush.msra.mxu0 0.0
    %321 = vmatpush.msra.mxu0 0.0
    %322 = vmatpush.msra.mxu0 0.0
    %323 = vmatpush.msra.mxu0 0.0
    %324 = vmatpush.msra.mxu0 0.0
    %325 = vmatpush.msra.mxu0 %v83
    %326 = vmatpush.msra.mxu0 %v82
    %327 = vmatpush.msra.mxu0 %v81
    %328 = vmatpush.msra.mxu0 %v80
    %329 = vmatmul.f32.gmra.mxu0 %v311
    %v330 = vpop.f32.mrf.mxu0
    %v331 = vadd.f32 0.0, %v330
    %332 = vdwg.mxu0
    %v333 = vadd.f32 %v144, %v331
    %v334 = vxor.u32 %v333, 2147483648
    %v335 = vmul.f32 %v334, 1.442695
    %v336 = vpow.pop %v335
    %v337 = vadd.f32 %v336, 1.0
    %v338 = vrcp.pop %v337
    %v339 = vmul.f32 %v337, %v338
    %v340 = vsub.f32 1.0, %v339
    %v341 = vmul.f32 %v338, %v340
    %v342 = vadd.f32 %v338, %v341
    %vm343 = vweird.f32 %v337
    %vm344 = vweird.f32 %v338
    %vm345 = vmor %vm343, %vm344
    %v346 = vsel %vm345, %v338, %v342
    %v347 = vand.u32 2147483647, %v337
    %vm348 = vcmp.eq.f32.partialorder %v347, 8.507059e+37
    %v349 = vand.u32 %v337, 2147483648
    %v350 = vor.u32 1.1754944e-38, %v349
    %v351 = vsel %vm348, %v350, %v346
    %v352 = vmul.f32 1.0, %v351
    %v353 = vadd.f32 %v331, %v207
    %355 = vrot.lane.b32.xlu0 %v353, 64
    %v356 = vpop.permute.xlu0 %355
    %v358 = vmul.f32 %v352, %v356
    %360 = vrot.lane.b32.xlu0 %v358, 64
    %v361 = vpop.permute.xlu0 %360
    %v363 = vadd.f32 %v144, %v361
    %v364 = vtanh.pop %v363
    %v365 = vsub.f32 %v305, %v364
    %367 = vrot.lane.b32.xlu0 %v365, 96
    %v368 = vpop.permute.xlu0 %367
    %v370 = vmul.f32 %v352, %v368
    %372 = vrot.lane.b32.xlu0 %v370, 32
    %v373 = vpop.permute.xlu0 %372
    %v375 = vadd.f32 %v364, %v373
    %377 = vrot.lane.b32.xlu0 %v375, 64
    %v378 = vpop.permute.xlu0 %377
    %380 = vst.msk [vmem:[#allocation2 + $0x10] sm:$0xff] %vm162, %v378
    %v381 = vsel %vm162, %v378, 0
    %383 = vmatpush.msra.mxu0 0.0
    %384 = vmatpush.msra.mxu0 0.0
    %385 = vmatpush.msra.mxu0 0.0
    %386 = vmatpush.msra.mxu0 0.0
    %387 = vmatpush.msra.mxu0 0.0
    %388 = vmatpush.msra.mxu0 0.0
    %389 = vmatpush.msra.mxu0 0.0
    %390 = vmatpush.msra.mxu0 0.0
    %391 = vmatpush.msra.mxu0 0.0
    %392 = vmatpush.msra.mxu0 0.0
    %393 = vmatpush.msra.mxu0 0.0
    %394 = vmatpush.msra.mxu0 0.0
    %395 = vmatpush.msra.mxu0 %v83
    %396 = vmatpush.msra.mxu0 %v82
    %397 = vmatpush.msra.mxu0 %v81
    %398 = vmatpush.msra.mxu0 %v80
    %399 = vmatmul.f32.gmra.mxu0 %v381
    %v400 = vpop.f32.mrf.mxu0
    %v401 = vadd.f32 0.0, %v400
    %402 = vdwg.mxu0
    %v403 = vadd.f32 %v147, %v401
    %v404 = vxor.u32 %v403, 2147483648
    %v405 = vmul.f32 %v404, 1.442695
    %v406 = vpow.pop %v405
    %v407 = vadd.f32 %v406, 1.0
    %v408 = vrcp.pop %v407
    %v409 = vmul.f32 %v407, %v408
    %v410 = vsub.f32 1.0, %v409
    %v411 = vmul.f32 %v408, %v410
    %v412 = vadd.f32 %v408, %v411
    %vm413 = vweird.f32 %v407
    %vm414 = vweird.f32 %v408
    %vm415 = vmor %vm413, %vm414
    %v416 = vsel %vm415, %v408, %v412
    %v417 = vand.u32 2147483647, %v407
    %vm418 = vcmp.eq.f32.partialorder %v417, 8.507059e+37
    %v419 = vand.u32 %v407, 2147483648
    %v420 = vor.u32 1.1754944e-38, %v419
    %v421 = vsel %vm418, %v420, %v416
    %v422 = vmul.f32 1.0, %v421
    %v423 = vadd.f32 %v401, %v207
    %425 = vrot.lane.b32.xlu0 %v423, 64
    %v426 = vpop.permute.xlu0 %425
    %v428 = vmul.f32 %v422, %v426
    %430 = vrot.lane.b32.xlu0 %v428, 64
    %v431 = vpop.permute.xlu0 %430
    %v433 = vadd.f32 %v147, %v431
    %v434 = vtanh.pop %v433
    %v435 = vsub.f32 %v375, %v434
    %437 = vrot.lane.b32.xlu0 %v435, 96
    %v438 = vpop.permute.xlu0 %437
    %v440 = vmul.f32 %v422, %v438
    %442 = vrot.lane.b32.xlu0 %v440, 32
    %v443 = vpop.permute.xlu0 %442
    %v445 = vadd.f32 %v434, %v443
    %447 = vrot.lane.b32.xlu0 %v445, 64
    %v448 = vpop.permute.xlu0 %447
    %450 = vst.msk [vmem:[#allocation2 + $0x18] sm:$0xff] %vm162, %v448
    %v451 = vsel %vm162, %v448, 0
    %453 = vmatpush.msra.mxu0 0.0
    %454 = vmatpush.msra.mxu0 0.0
    %455 = vmatpush.msra.mxu0 0.0
    %456 = vmatpush.msra.mxu0 0.0
    %457 = vmatpush.msra.mxu0 0.0
    %458 = vmatpush.msra.mxu0 0.0
    %459 = vmatpush.msra.mxu0 0.0
    %460 = vmatpush.msra.mxu0 0.0
    %461 = vmatpush.msra.mxu0 0.0
    %462 = vmatpush.msra.mxu0 0.0
    %463 = vmatpush.msra.mxu0 0.0
    %464 = vmatpush.msra.mxu0 0.0
    %465 = vmatpush.msra.mxu0 %v83
    %466 = vmatpush.msra.mxu0 %v82
    %467 = vmatpush.msra.mxu0 %v81
    %468 = vmatpush.msra.mxu0 %v80
    %469 = vmatmul.f32.gmra.mxu0 %v451
    %v470 = vpop.f32.mrf.mxu0
    %v471 = vadd.f32 0.0, %v470
    %472 = vdwg.mxu0
    %v473 = vadd.f32 %v150, %v471
    %v474 = vxor.u32 %v473, 2147483648
    %v475 = vmul.f32 %v474, 1.442695
    %v476 = vpow.pop %v475
    %v477 = vadd.f32 %v476, 1.0
    %v478 = vrcp.pop %v477
    %v479 = vmul.f32 %v477, %v478
    %v480 = vsub.f32 1.0, %v479
    %v481 = vmul.f32 %v478, %v480
    %v482 = vadd.f32 %v478, %v481
    %vm483 = vweird.f32 %v477
    %vm484 = vweird.f32 %v478
    %vm485 = vmor %vm483, %vm484
    %v486 = vsel %vm485, %v478, %v482
    %v487 = vand.u32 2147483647, %v477
    %vm488 = vcmp.eq.f32.partialorder %v487, 8.507059e+37
    %v489 = vand.u32 %v477, 2147483648
    %v490 = vor.u32 1.1754944e-38, %v489
    %v491 = vsel %vm488, %v490, %v486
    %v492 = vmul.f32 1.0, %v491
    %v493 = vadd.f32 %v471, %v207
    %495 = vrot.lane.b32.xlu0 %v493, 64
    %v496 = vpop.permute.xlu0 %495
    %v498 = vmul.f32 %v492, %v496
    %500 = vrot.lane.b32.xlu0 %v498, 64
    %v501 = vpop.permute.xlu0 %500
    %v503 = vadd.f32 %v150, %v501
    %v504 = vtanh.pop %v503
    %v505 = vsub.f32 %v445, %v504
    %507 = vrot.lane.b32.xlu0 %v505, 96
    %v508 = vpop.permute.xlu0 %507
    %v510 = vmul.f32 %v492, %v508
    %512 = vrot.lane.b32.xlu0 %v510, 32
    %v513 = vpop.permute.xlu0 %512
    %v515 = vadd.f32 %v504, %v513
    %517 = vrot.lane.b32.xlu0 %v515, 64
    %v518 = vpop.permute.xlu0 %517
    %520 = vst.msk [vmem:[#allocation2 + $0x20] sm:$0xff] %vm162, %v518
    %v521 = vsel %vm162, %v518, 0
    %523 = vmatpush.msra.mxu0 0.0
    %524 = vmatpush.msra.mxu0 0.0
    %525 = vmatpush.msra.mxu0 0.0
    %526 = vmatpush.msra.mxu0 0.0
    %527 = vmatpush.msra.mxu0 0.0
    %528 = vmatpush.msra.mxu0 0.0
    %529 = vmatpush.msra.mxu0 0.0
    %530 = vmatpush.msra.mxu0 0.0
    %531 = vmatpush.msra.mxu0 0.0
    %532 = vmatpush.msra.mxu0 0.0
    %533 = vmatpush.msra.mxu0 0.0
    %534 = vmatpush.msra.mxu0 0.0
    %535 = vmatpush.msra.mxu0 %v83
    %536 = vmatpush.msra.mxu0 %v82
    %537 = vmatpush.msra.mxu0 %v81
    %538 = vmatpush.msra.mxu0 %v80
    %539 = vmatmul.f32.gmra.mxu0 %v521
    %v540 = vpop.f32.mrf.mxu0
    %v541 = vadd.f32 0.0, %v540
    %542 = vdwg.mxu0
    %v543 = vadd.f32 %v153, %v541
    %v544 = vxor.u32 %v543, 2147483648
    %v545 = vmul.f32 %v544, 1.442695
    %v546 = vpow.pop %v545
    %v547 = vadd.f32 %v546, 1.0
    %v548 = vrcp.pop %v547
    %v549 = vmul.f32 %v547, %v548
    %v550 = vsub.f32 1.0, %v549
    %v551 = vmul.f32 %v548, %v550
    %v552 = vadd.f32 %v548, %v551
    %vm553 = vweird.f32 %v547
    %vm554 = vweird.f32 %v548
    %vm555 = vmor %vm553, %vm554
    %v556 = vsel %vm555, %v548, %v552
    %v557 = vand.u32 2147483647, %v547
    %vm558 = vcmp.eq.f32.partialorder %v557, 8.507059e+37
    %v559 = vand.u32 %v547, 2147483648
    %v560 = vor.u32 1.1754944e-38, %v559
    %v561 = vsel %vm558, %v560, %v556
    %v562 = vmul.f32 1.0, %v561
    %v563 = vadd.f32 %v541, %v207
    %565 = vrot.lane.b32.xlu0 %v563, 64
    %v566 = vpop.permute.xlu0 %565
    %v568 = vmul.f32 %v562, %v566
    %570 = vrot.lane.b32.xlu0 %v568, 64
    %v571 = vpop.permute.xlu0 %570
    %v573 = vadd.f32 %v153, %v571
    %v574 = vtanh.pop %v573
    %v575 = vsub.f32 %v515, %v574
    %577 = vrot.lane.b32.xlu0 %v575, 96
    %v578 = vpop.permute.xlu0 %577
    %v580 = vmul.f32 %v562, %v578
    %582 = vrot.lane.b32.xlu0 %v580, 32
    %v583 = vpop.permute.xlu0 %582
    %v585 = vadd.f32 %v574, %v583
    %587 = vrot.lane.b32.xlu0 %v585, 64
    %v588 = vpop.permute.xlu0 %587
    %590 = vst.msk [vmem:[#allocation2 + $0x28] sm:$0xff] %vm162, %v588
    %v591 = vsel %vm162, %v588, 0
    %593 = vmatpush.msra.mxu0 0.0
    %594 = vmatpush.msra.mxu0 0.0
    %595 = vmatpush.msra.mxu0 0.0
    %596 = vmatpush.msra.mxu0 0.0
    %597 = vmatpush.msra.mxu0 0.0
    %598 = vmatpush.msra.mxu0 0.0
    %599 = vmatpush.msra.mxu0 0.0
    %600 = vmatpush.msra.mxu0 0.0
    %601 = vmatpush.msra.mxu0 0.0
    %602 = vmatpush.msra.mxu0 0.0
    %603 = vmatpush.msra.mxu0 0.0
    %604 = vmatpush.msra.mxu0 0.0
    %605 = vmatpush.msra.mxu0 %v83
    %606 = vmatpush.msra.mxu0 %v82
    %607 = vmatpush.msra.mxu0 %v81
    %608 = vmatpush.msra.mxu0 %v80
    %609 = vmatmul.f32.gmra.mxu0 %v591
    %v610 = vpop.f32.mrf.mxu0
    %v611 = vadd.f32 0.0, %v610
    %612 = vdwg.mxu0
    %v613 = vadd.f32 %v156, %v611
    %v614 = vxor.u32 %v613, 2147483648
    %v615 = vmul.f32 %v614, 1.442695
    %v616 = vpow.pop %v615
    %v617 = vadd.f32 %v616, 1.0
    %v618 = vrcp.pop %v617
    %v619 = vmul.f32 %v617, %v618
    %v620 = vsub.f32 1.0, %v619
    %v621 = vmul.f32 %v618, %v620
    %v622 = vadd.f32 %v618, %v621
    %vm623 = vweird.f32 %v617
    %vm624 = vweird.f32 %v618
    %vm625 = vmor %vm623, %vm624
    %v626 = vsel %vm625, %v618, %v622
    %v627 = vand.u32 2147483647, %v617
    %vm628 = vcmp.eq.f32.partialorder %v627, 8.507059e+37
    %v629 = vand.u32 %v617, 2147483648
    %v630 = vor.u32 1.1754944e-38, %v629
    %v631 = vsel %vm628, %v630, %v626
    %v632 = vmul.f32 1.0, %v631
    %v633 = vadd.f32 %v611, %v207
    %635 = vrot.lane.b32.xlu0 %v633, 64
    %v636 = vpop.permute.xlu0 %635
    %v638 = vmul.f32 %v632, %v636
    %640 = vrot.lane.b32.xlu0 %v638, 64
    %v641 = vpop.permute.xlu0 %640
    %v643 = vadd.f32 %v156, %v641
    %v644 = vtanh.pop %v643
    %v645 = vsub.f32 %v585, %v644
    %647 = vrot.lane.b32.xlu0 %v645, 96
    %v648 = vpop.permute.xlu0 %647
    %v650 = vmul.f32 %v632, %v648
    %652 = vrot.lane.b32.xlu0 %v650, 32
    %v653 = vpop.permute.xlu0 %652
    %v655 = vadd.f32 %v644, %v653
    %657 = vrot.lane.b32.xlu0 %v655, 64
    %v658 = vpop.permute.xlu0 %657
    %660 = vst.msk [vmem:[#allocation2 + $0x30] sm:$0xff] %vm162, %v658
    %v661 = vsel %vm162, %v658, 0
    %663 = vmatpush.msra.mxu0 0.0
    %664 = vmatpush.msra.mxu0 0.0
    %665 = vmatpush.msra.mxu0 0.0
    %666 = vmatpush.msra.mxu0 0.0
    %667 = vmatpush.msra.mxu0 0.0
    %668 = vmatpush.msra.mxu0 0.0
    %669 = vmatpush.msra.mxu0 0.0
    %670 = vmatpush.msra.mxu0 0.0
    %671 = vmatpush.msra.mxu0 0.0
    %672 = vmatpush.msra.mxu0 0.0
    %673 = vmatpush.msra.mxu0 0.0
    %674 = vmatpush.msra.mxu0 0.0
    %675 = vmatpush.msra.mxu0 %v83
    %676 = vmatpush.msra.mxu0 %v82
    %677 = vmatpush.msra.mxu0 %v81
    %678 = vmatpush.msra.mxu0 %v80
    %679 = vmatmul.f32.gmra.mxu0 %v661
    %v680 = vpop.f32.mrf.mxu0
    %v681 = vadd.f32 0.0, %v680
    %682 = vdwg.mxu0
    %v683 = vadd.f32 %v159, %v681
    %v684 = vxor.u32 %v683, 2147483648
    %v685 = vmul.f32 %v684, 1.442695
    %v686 = vpow.pop %v685
    %v687 = vadd.f32 %v686, 1.0
    %v688 = vrcp.pop %v687
    %v689 = vmul.f32 %v687, %v688
    %v690 = vsub.f32 1.0, %v689
    %v691 = vmul.f32 %v688, %v690
    %v692 = vadd.f32 %v688, %v691
    %vm693 = vweird.f32 %v687
    %vm694 = vweird.f32 %v688
    %vm695 = vmor %vm693, %vm694
    %v696 = vsel %vm695, %v688, %v692
    %v697 = vand.u32 2147483647, %v687
    %vm698 = vcmp.eq.f32.partialorder %v697, 8.507059e+37
    %v699 = vand.u32 %v687, 2147483648
    %v700 = vor.u32 1.1754944e-38, %v699
    %v701 = vsel %vm698, %v700, %v696
    %v702 = vmul.f32 1.0, %v701
    %v703 = vadd.f32 %v681, %v207
    %705 = vrot.lane.b32.xlu0 %v703, 64
    %v706 = vpop.permute.xlu0 %705
    %v708 = vmul.f32 %v702, %v706
    %710 = vrot.lane.b32.xlu0 %v708, 64
    %v711 = vpop.permute.xlu0 %710
    %v713 = vadd.f32 %v159, %v711
    %v714 = vtanh.pop %v713
    %v715 = vsub.f32 %v655, %v714
    %717 = vrot.lane.b32.xlu0 %v715, 96
    %v718 = vpop.permute.xlu0 %717
    %v720 = vmul.f32 %v702, %v718
    %722 = vrot.lane.b32.xlu0 %v720, 32
    %v723 = vpop.permute.xlu0 %722
    %v725 = vadd.f32 %v714, %v723
    %727 = vrot.lane.b32.xlu0 %v725, 64
    %v728 = vpop.permute.xlu0 %727
    %730 = vst.msk [vmem:[#allocation2 + $0x38] sm:$0xff] %vm162, %v728
    %v731 = vld [vmem:[#allocation2] sm:$0xff]
    %v732 = vld [vmem:[#allocation2 + $0x8] sm:$0xff]
    %v733 = vld [vmem:[#allocation2 + $0x10] sm:$0xff]
    %v734 = vld [vmem:[#allocation2 + $0x18] sm:$0xff]
    %v735 = vld [vmem:[#allocation2 + $0x20] sm:$0xff]
    %v736 = vld [vmem:[#allocation2 + $0x28] sm:$0xff]
    %v737 = vld [vmem:[#allocation2 + $0x30] sm:$0xff]
    %v738 = vld [vmem:[#allocation2 + $0x38] sm:$0xff]
    %v739 = vld [vmem:[%s6] sm:$0xff]
    %v740 = vld [vmem:[%s6 + $0x8] sm:$0xff]
    %v741 = vld [vmem:[%s6 + $0x10] sm:$0xff]
    %v742 = vld [vmem:[%s6 + $0x18] sm:$0xff]
    %v743 = vld [vmem:[%s7] sm:$0xff]
    %v744 = vld [vmem:[%s7 + $0x8] sm:$0xff]
    %v745 = vld [vmem:[%s7 + $0x10] sm:$0xff]
    %v746 = vld [vmem:[%s7 + $0x18] sm:$0xff]
    %v747 = vld [vmem:[#allocation5] sm:$0x1]
    %v749 = vperm.slane %v747, 0
    %v750 = vld [vmem:[%s8] sm:$0x1]
    %v752 = vperm.slane %v750, 0
    %v755 = vsel %vm162, %v731, 0
    %v758 = vsel %vm162, %v732, 0
    %v761 = vsel %vm162, %v733, 0
    %v764 = vsel %vm162, %v734, 0
    %v767 = vsel %vm162, %v735, 0
    %v770 = vsel %vm162, %v736, 0
    %v773 = vsel %vm162, %v737, 0
    %v776 = vsel %vm162, %v738, 0
    %778 = vmatpush.msra.mxu0 0.0
    %779 = vmatpush.msra.mxu0 0.0
    %780 = vmatpush.msra.mxu0 0.0
    %781 = vmatpush.msra.mxu0 0.0
    %782 = vmatpush.msra.mxu0 0.0
    %783 = vmatpush.msra.mxu0 0.0
    %784 = vmatpush.msra.mxu0 0.0
    %785 = vmatpush.msra.mxu0 0.0
    %786 = vmatpush.msra.mxu0 0.0
    %787 = vmatpush.msra.mxu0 0.0
    %788 = vmatpush.msra.mxu0 0.0
    %789 = vmatpush.msra.mxu0 0.0
    %790 = vmatpush.msra.mxu0 %v742
    %791 = vmatpush.msra.mxu0 %v741
    %792 = vmatpush.msra.mxu0 %v740
    %793 = vmatpush.msra.mxu0 %v739
    %794 = vmatmul.f32.gmra.mxu0 %v755
    %v795 = vpop.f32.mrf.mxu0
    %v796 = vadd.f32 %v752, %v795
    %797 = vmatmul.f32.gmra.mxu0 %v758
    %v798 = vpop.f32.mrf.mxu0
    %v799 = vadd.f32 %v752, %v798
    %800 = vmatmul.f32.gmra.mxu0 %v761
    %v801 = vpop.f32.mrf.mxu0
    %v802 = vadd.f32 %v752, %v801
    %803 = vmatmul.f32.gmra.mxu0 %v764
    %v804 = vpop.f32.mrf.mxu0
    %v805 = vadd.f32 %v752, %v804
    %806 = vmatmul.f32.gmra.mxu0 %v767
    %v807 = vpop.f32.mrf.mxu0
    %v808 = vadd.f32 %v752, %v807
    %809 = vmatmul.f32.gmra.mxu0 %v770
    %v810 = vpop.f32.mrf.mxu0
    %v811 = vadd.f32 %v752, %v810
    %812 = vmatmul.f32.gmra.mxu0 %v773
    %v813 = vpop.f32.mrf.mxu0
    %v814 = vadd.f32 %v752, %v813
    %815 = vmatmul.f32.gmra.mxu0 %v776
    %v816 = vpop.f32.mrf.mxu0
    %v817 = vadd.f32 %v752, %v816
    %818 = vdwg.mxu0
    %s819 = scalar_lea.vmem [#allocation3], 8
    %v820 = vld [vmem:[%s819] sm:$0xff]
    %v822 = vsel %vm162, %v820, 0
    %824 = vmatpush.msra.mxu0 0.0
    %825 = vmatpush.msra.mxu0 0.0
    %826 = vmatpush.msra.mxu0 0.0
    %827 = vmatpush.msra.mxu0 0.0
    %828 = vmatpush.msra.mxu0 0.0
    %829 = vmatpush.msra.mxu0 0.0
    %830 = vmatpush.msra.mxu0 0.0
    %831 = vmatpush.msra.mxu0 0.0
    %832 = vmatpush.msra.mxu0 0.0
    %833 = vmatpush.msra.mxu0 0.0
    %834 = vmatpush.msra.mxu0 0.0
    %835 = vmatpush.msra.mxu0 0.0
    %836 = vmatpush.msra.mxu0 %v746
    %837 = vmatpush.msra.mxu0 %v745
    %838 = vmatpush.msra.mxu0 %v744
    %839 = vmatpush.msra.mxu0 %v743
    %840 = vmatmul.f32.gmra.mxu0 %v822
    %v841 = vpop.f32.mrf.mxu0
    %v842 = vadd.f32 0.0, %v841
    %843 = vdwg.mxu0
    %v844 = vadd.f32 %v796, %v842
    %v845 = vxor.u32 %v844, 2147483648
    %v846 = vmul.f32 %v845, 1.442695
    %v847 = vpow.pop %v846
    %v848 = vadd.f32 %v847, 1.0
    %v849 = vrcp.pop %v848
    %v850 = vmul.f32 %v848, %v849
    %v851 = vsub.f32 1.0, %v850
    %v852 = vmul.f32 %v849, %v851
    %v853 = vadd.f32 %v849, %v852
    %vm854 = vweird.f32 %v848
    %vm855 = vweird.f32 %v849
    %vm856 = vmor %vm854, %vm855
    %v857 = vsel %vm856, %v849, %v853
    %v858 = vand.u32 2147483647, %v848
    %vm859 = vcmp.eq.f32.partialorder %v858, 8.507059e+37
    %v860 = vand.u32 %v848, 2147483648
    %v861 = vor.u32 1.1754944e-38, %v860
    %v862 = vsel %vm859, %v861, %v857
    %v863 = vmul.f32 1.0, %v862
    %864 = vrot.lane.b32.xlu0 %v749, 64
    %v865 = vpop.permute.xlu0 %864
    %v867 = vadd.f32 %v842, %v865
    %869 = vrot.lane.b32.xlu0 %v867, 64
    %v870 = vpop.permute.xlu0 %869
    %v872 = vmul.f32 %v863, %v870
    %874 = vrot.lane.b32.xlu0 %v872, 64
    %v875 = vpop.permute.xlu0 %874
    %v877 = vadd.f32 %v796, %v875
    %v878 = vtanh.pop %v877
    %880 = vrot.lane.b32.xlu0 %v878, 64
    %v881 = vpop.permute.xlu0 %880
    %v883 = vsub.f32 %v820, %v881
    %885 = vrot.lane.b32.xlu0 %v883, 32
    %v886 = vpop.permute.xlu0 %885
    %v888 = vmul.f32 %v863, %v886
    %890 = vrot.lane.b32.xlu0 %v888, 32
    %v891 = vpop.permute.xlu0 %890
    %v893 = vadd.f32 %v878, %v891
    %895 = vrot.lane.b32.xlu0 %v893, 64
    %v896 = vpop.permute.xlu0 %895
    %v897 = vsel %vm162, %v896, 0
    %899 = vmatpush.msra.mxu0 0.0
    %900 = vmatpush.msra.mxu0 0.0
    %901 = vmatpush.msra.mxu0 0.0
    %902 = vmatpush.msra.mxu0 0.0
    %903 = vmatpush.msra.mxu0 0.0
    %904 = vmatpush.msra.mxu0 0.0
    %905 = vmatpush.msra.mxu0 0.0
    %906 = vmatpush.msra.mxu0 0.0
    %907 = vmatpush.msra.mxu0 0.0
    %908 = vmatpush.msra.mxu0 0.0
    %909 = vmatpush.msra.mxu0 0.0
    %910 = vmatpush.msra.mxu0 0.0
    %911 = vmatpush.msra.mxu0 %v746
    %912 = vmatpush.msra.mxu0 %v745
    %913 = vmatpush.msra.mxu0 %v744
    %914 = vmatpush.msra.mxu0 %v743
    %915 = vmatmul.f32.gmra.mxu0 %v897
    %v916 = vpop.f32.mrf.mxu0
    %v917 = vadd.f32 0.0, %v916
    %918 = vdwg.mxu0
    %v919 = vadd.f32 %v799, %v917
    %v920 = vxor.u32 %v919, 2147483648
    %v921 = vmul.f32 %v920, 1.442695
    %v922 = vpow.pop %v921
    %v923 = vadd.f32 %v922, 1.0
    %v924 = vrcp.pop %v923
    %v925 = vmul.f32 %v923, %v924
    %v926 = vsub.f32 1.0, %v925
    %v927 = vmul.f32 %v924, %v926
    %v928 = vadd.f32 %v924, %v927
    %vm929 = vweird.f32 %v923
    %vm930 = vweird.f32 %v924
    %vm931 = vmor %vm929, %vm930
    %v932 = vsel %vm931, %v924, %v928
    %v933 = vand.u32 2147483647, %v923
    %vm934 = vcmp.eq.f32.partialorder %v933, 8.507059e+37
    %v935 = vand.u32 %v923, 2147483648
    %v936 = vor.u32 1.1754944e-38, %v935
    %v937 = vsel %vm934, %v936, %v932
    %v938 = vmul.f32 1.0, %v937
    %v939 = vadd.f32 %v917, %v865
    %941 = vrot.lane.b32.xlu0 %v939, 64
    %v942 = vpop.permute.xlu0 %941
    %v944 = vmul.f32 %v938, %v942
    %946 = vrot.lane.b32.xlu0 %v944, 64
    %v947 = vpop.permute.xlu0 %946
    %v949 = vadd.f32 %v799, %v947
    %v950 = vtanh.pop %v949
    %v951 = vsub.f32 %v893, %v950
    %953 = vrot.lane.b32.xlu0 %v951, 96
    %v954 = vpop.permute.xlu0 %953
    %v956 = vmul.f32 %v938, %v954
    %958 = vrot.lane.b32.xlu0 %v956, 32
    %v959 = vpop.permute.xlu0 %958
    %v961 = vadd.f32 %v950, %v959
    %963 = vrot.lane.b32.xlu0 %v961, 64
    %v964 = vpop.permute.xlu0 %963
    %v965 = vsel %vm162, %v964, 0
    %967 = vmatpush.msra.mxu0 0.0
    %968 = vmatpush.msra.mxu0 0.0
    %969 = vmatpush.msra.mxu0 0.0
    %970 = vmatpush.msra.mxu0 0.0
    %971 = vmatpush.msra.mxu0 0.0
    %972 = vmatpush.msra.mxu0 0.0
    %973 = vmatpush.msra.mxu0 0.0
    %974 = vmatpush.msra.mxu0 0.0
    %975 = vmatpush.msra.mxu0 0.0
    %976 = vmatpush.msra.mxu0 0.0
    %977 = vmatpush.msra.mxu0 0.0
    %978 = vmatpush.msra.mxu0 0.0
    %979 = vmatpush.msra.mxu0 %v746
    %980 = vmatpush.msra.mxu0 %v745
    %981 = vmatpush.msra.mxu0 %v744
    %982 = vmatpush.msra.mxu0 %v743
    %983 = vmatmul.f32.gmra.mxu0 %v965
    %v984 = vpop.f32.mrf.mxu0
    %v985 = vadd.f32 0.0, %v984
    %986 = vdwg.mxu0
    %v987 = vadd.f32 %v802, %v985
    %v988 = vxor.u32 %v987, 2147483648
    %v989 = vmul.f32 %v988, 1.442695
    %v990 = vpow.pop %v989
    %v991 = vadd.f32 %v990, 1.0
    %v992 = vrcp.pop %v991
    %v993 = vmul.f32 %v991, %v992
    %v994 = vsub.f32 1.0, %v993
    %v995 = vmul.f32 %v992, %v994
    %v996 = vadd.f32 %v992, %v995
    %vm997 = vweird.f32 %v991
    %vm998 = vweird.f32 %v992
    %vm999 = vmor %vm997, %vm998
    %v1000 = vsel %vm999, %v992, %v996
    %v1001 = vand.u32 2147483647, %v991
    %vm1002 = vcmp.eq.f32.partialorder %v1001, 8.507059e+37
    %v1003 = vand.u32 %v991, 2147483648
    %v1004 = vor.u32 1.1754944e-38, %v1003
    %v1005 = vsel %vm1002, %v1004, %v1000
    %v1006 = vmul.f32 1.0, %v1005
    %v1007 = vadd.f32 %v985, %v865
    %1009 = vrot.lane.b32.xlu0 %v1007, 64
    %v1010 = vpop.permute.xlu0 %1009
    %v1012 = vmul.f32 %v1006, %v1010
    %1014 = vrot.lane.b32.xlu0 %v1012, 64
    %v1015 = vpop.permute.xlu0 %1014
    %v1017 = vadd.f32 %v802, %v1015
    %v1018 = vtanh.pop %v1017
    %v1019 = vsub.f32 %v961, %v1018
    %1021 = vrot.lane.b32.xlu0 %v1019, 96
    %v1022 = vpop.permute.xlu0 %1021
    %v1024 = vmul.f32 %v1006, %v1022
    %1026 = vrot.lane.b32.xlu0 %v1024, 32
    %v1027 = vpop.permute.xlu0 %1026
    %v1029 = vadd.f32 %v1018, %v1027
    %1031 = vrot.lane.b32.xlu0 %v1029, 64
    %v1032 = vpop.permute.xlu0 %1031
    %v1033 = vsel %vm162, %v1032, 0
    %1035 = vmatpush.msra.mxu0 0.0
    %1036 = vmatpush.msra.mxu0 0.0
    %1037 = vmatpush.msra.mxu0 0.0
    %1038 = vmatpush.msra.mxu0 0.0
    %1039 = vmatpush.msra.mxu0 0.0
    %1040 = vmatpush.msra.mxu0 0.0
    %1041 = vmatpush.msra.mxu0 0.0
    %1042 = vmatpush.msra.mxu0 0.0
    %1043 = vmatpush.msra.mxu0 0.0
    %1044 = vmatpush.msra.mxu0 0.0
    %1045 = vmatpush.msra.mxu0 0.0
    %1046 = vmatpush.msra.mxu0 0.0
    %1047 = vmatpush.msra.mxu0 %v746
    %1048 = vmatpush.msra.mxu0 %v745
    %1049 = vmatpush.msra.mxu0 %v744
    %1050 = vmatpush.msra.mxu0 %v743
    %1051 = vmatmul.f32.gmra.mxu0 %v1033
    %v1052 = vpop.f32.mrf.mxu0
    %v1053 = vadd.f32 0.0, %v1052
    %1054 = vdwg.mxu0
    %v1055 = vadd.f32 %v805, %v1053
    %v1056 = vxor.u32 %v1055, 2147483648
    %v1057 = vmul.f32 %v1056, 1.442695
    %v1058 = vpow.pop %v1057
    %v1059 = vadd.f32 %v1058, 1.0
    %v1060 = vrcp.pop %v1059
    %v1061 = vmul.f32 %v1059, %v1060
    %v1062 = vsub.f32 1.0, %v1061
    %v1063 = vmul.f32 %v1060, %v1062
    %v1064 = vadd.f32 %v1060, %v1063
    %vm1065 = vweird.f32 %v1059
    %vm1066 = vweird.f32 %v1060
    %vm1067 = vmor %vm1065, %vm1066
    %v1068 = vsel %vm1067, %v1060, %v1064
    %v1069 = vand.u32 2147483647, %v1059
    %vm1070 = vcmp.eq.f32.partialorder %v1069, 8.507059e+37
    %v1071 = vand.u32 %v1059, 2147483648
    %v1072 = vor.u32 1.1754944e-38, %v1071
    %v1073 = vsel %vm1070, %v1072, %v1068
    %v1074 = vmul.f32 1.0, %v1073
    %v1075 = vadd.f32 %v1053, %v865
    %1077 = vrot.lane.b32.xlu0 %v1075, 64
    %v1078 = vpop.permute.xlu0 %1077
    %v1080 = vmul.f32 %v1074, %v1078
    %1082 = vrot.lane.b32.xlu0 %v1080, 64
    %v1083 = vpop.permute.xlu0 %1082
    %v1085 = vadd.f32 %v805, %v1083
    %v1086 = vtanh.pop %v1085
    %v1087 = vsub.f32 %v1029, %v1086
    %1089 = vrot.lane.b32.xlu0 %v1087, 96
    %v1090 = vpop.permute.xlu0 %1089
    %v1092 = vmul.f32 %v1074, %v1090
    %1094 = vrot.lane.b32.xlu0 %v1092, 32
    %v1095 = vpop.permute.xlu0 %1094
    %v1097 = vadd.f32 %v1086, %v1095
    %1099 = vrot.lane.b32.xlu0 %v1097, 64
    %v1100 = vpop.permute.xlu0 %1099
    %v1101 = vsel %vm162, %v1100, 0
    %1103 = vmatpush.msra.mxu0 0.0
    %1104 = vmatpush.msra.mxu0 0.0
    %1105 = vmatpush.msra.mxu0 0.0
    %1106 = vmatpush.msra.mxu0 0.0
    %1107 = vmatpush.msra.mxu0 0.0
    %1108 = vmatpush.msra.mxu0 0.0
    %1109 = vmatpush.msra.mxu0 0.0
    %1110 = vmatpush.msra.mxu0 0.0
    %1111 = vmatpush.msra.mxu0 0.0
    %1112 = vmatpush.msra.mxu0 0.0
    %1113 = vmatpush.msra.mxu0 0.0
    %1114 = vmatpush.msra.mxu0 0.0
    %1115 = vmatpush.msra.mxu0 %v746
    %1116 = vmatpush.msra.mxu0 %v745
    %1117 = vmatpush.msra.mxu0 %v744
    %1118 = vmatpush.msra.mxu0 %v743
    %1119 = vmatmul.f32.gmra.mxu0 %v1101
    %v1120 = vpop.f32.mrf.mxu0
    %v1121 = vadd.f32 0.0, %v1120
    %1122 = vdwg.mxu0
    %v1123 = vadd.f32 %v808, %v1121
    %v1124 = vxor.u32 %v1123, 2147483648
    %v1125 = vmul.f32 %v1124, 1.442695
    %v1126 = vpow.pop %v1125
    %v1127 = vadd.f32 %v1126, 1.0
    %v1128 = vrcp.pop %v1127
    %v1129 = vmul.f32 %v1127, %v1128
    %v1130 = vsub.f32 1.0, %v1129
    %v1131 = vmul.f32 %v1128, %v1130
    %v1132 = vadd.f32 %v1128, %v1131
    %vm1133 = vweird.f32 %v1127
    %vm1134 = vweird.f32 %v1128
    %vm1135 = vmor %vm1133, %vm1134
    %v1136 = vsel %vm1135, %v1128, %v1132
    %v1137 = vand.u32 2147483647, %v1127
    %vm1138 = vcmp.eq.f32.partialorder %v1137, 8.507059e+37
    %v1139 = vand.u32 %v1127, 2147483648
    %v1140 = vor.u32 1.1754944e-38, %v1139
    %v1141 = vsel %vm1138, %v1140, %v1136
    %v1142 = vmul.f32 1.0, %v1141
    %v1143 = vadd.f32 %v1121, %v865
    %1145 = vrot.lane.b32.xlu0 %v1143, 64
    %v1146 = vpop.permute.xlu0 %1145
    %v1148 = vmul.f32 %v1142, %v1146
    %1150 = vrot.lane.b32.xlu0 %v1148, 64
    %v1151 = vpop.permute.xlu0 %1150
    %v1153 = vadd.f32 %v808, %v1151
    %v1154 = vtanh.pop %v1153
    %v1155 = vsub.f32 %v1097, %v1154
    %1157 = vrot.lane.b32.xlu0 %v1155, 96
    %v1158 = vpop.permute.xlu0 %1157
    %v1160 = vmul.f32 %v1142, %v1158
    %1162 = vrot.lane.b32.xlu0 %v1160, 32
    %v1163 = vpop.permute.xlu0 %1162
    %v1165 = vadd.f32 %v1154, %v1163
    %1167 = vrot.lane.b32.xlu0 %v1165, 64
    %v1168 = vpop.permute.xlu0 %1167
    %v1169 = vsel %vm162, %v1168, 0
    %1171 = vmatpush.msra.mxu0 0.0
    %1172 = vmatpush.msra.mxu0 0.0
    %1173 = vmatpush.msra.mxu0 0.0
    %1174 = vmatpush.msra.mxu0 0.0
    %1175 = vmatpush.msra.mxu0 0.0
    %1176 = vmatpush.msra.mxu0 0.0
    %1177 = vmatpush.msra.mxu0 0.0
    %1178 = vmatpush.msra.mxu0 0.0
    %1179 = vmatpush.msra.mxu0 0.0
    %1180 = vmatpush.msra.mxu0 0.0
    %1181 = vmatpush.msra.mxu0 0.0
    %1182 = vmatpush.msra.mxu0 0.0
    %1183 = vmatpush.msra.mxu0 %v746
    %1184 = vmatpush.msra.mxu0 %v745
    %1185 = vmatpush.msra.mxu0 %v744
    %1186 = vmatpush.msra.mxu0 %v743
    %1187 = vmatmul.f32.gmra.mxu0 %v1169
    %v1188 = vpop.f32.mrf.mxu0
    %v1189 = vadd.f32 0.0, %v1188
    %1190 = vdwg.mxu0
    %v1191 = vadd.f32 %v811, %v1189
    %v1192 = vxor.u32 %v1191, 2147483648
    %v1193 = vmul.f32 %v1192, 1.442695
    %v1194 = vpow.pop %v1193
    %v1195 = vadd.f32 %v1194, 1.0
    %v1196 = vrcp.pop %v1195
    %v1197 = vmul.f32 %v1195, %v1196
    %v1198 = vsub.f32 1.0, %v1197
    %v1199 = vmul.f32 %v1196, %v1198
    %v1200 = vadd.f32 %v1196, %v1199
    %vm1201 = vweird.f32 %v1195
    %vm1202 = vweird.f32 %v1196
    %vm1203 = vmor %vm1201, %vm1202
    %v1204 = vsel %vm1203, %v1196, %v1200
    %v1205 = vand.u32 2147483647, %v1195
    %vm1206 = vcmp.eq.f32.partialorder %v1205, 8.507059e+37
    %v1207 = vand.u32 %v1195, 2147483648
    %v1208 = vor.u32 1.1754944e-38, %v1207
    %v1209 = vsel %vm1206, %v1208, %v1204
    %v1210 = vmul.f32 1.0, %v1209
    %v1211 = vadd.f32 %v1189, %v865
    %1213 = vrot.lane.b32.xlu0 %v1211, 64
    %v1214 = vpop.permute.xlu0 %1213
    %v1216 = vmul.f32 %v1210, %v1214
    %1218 = vrot.lane.b32.xlu0 %v1216, 64
    %v1219 = vpop.permute.xlu0 %1218
    %v1221 = vadd.f32 %v811, %v1219
    %v1222 = vtanh.pop %v1221
    %v1223 = vsub.f32 %v1165, %v1222
    %1225 = vrot.lane.b32.xlu0 %v1223, 96
    %v1226 = vpop.permute.xlu0 %1225
    %v1228 = vmul.f32 %v1210, %v1226
    %1230 = vrot.lane.b32.xlu0 %v1228, 32
    %v1231 = vpop.permute.xlu0 %1230
    %v1233 = vadd.f32 %v1222, %v1231
    %1235 = vrot.lane.b32.xlu0 %v1233, 64
    %v1236 = vpop.permute.xlu0 %1235
    %v1237 = vsel %vm162, %v1236, 0
    %1239 = vmatpush.msra.mxu0 0.0
    %1240 = vmatpush.msra.mxu0 0.0
    %1241 = vmatpush.msra.mxu0 0.0
    %1242 = vmatpush.msra.mxu0 0.0
    %1243 = vmatpush.msra.mxu0 0.0
    %1244 = vmatpush.msra.mxu0 0.0
    %1245 = vmatpush.msra.mxu0 0.0
    %1246 = vmatpush.msra.mxu0 0.0
    %1247 = vmatpush.msra.mxu0 0.0
    %1248 = vmatpush.msra.mxu0 0.0
    %1249 = vmatpush.msra.mxu0 0.0
    %1250 = vmatpush.msra.mxu0 0.0
    %1251 = vmatpush.msra.mxu0 %v746
    %1252 = vmatpush.msra.mxu0 %v745
    %1253 = vmatpush.msra.mxu0 %v744
    %1254 = vmatpush.msra.mxu0 %v743
    %1255 = vmatmul.f32.gmra.mxu0 %v1237
    %v1256 = vpop.f32.mrf.mxu0
    %v1257 = vadd.f32 0.0, %v1256
    %1258 = vdwg.mxu0
    %v1259 = vadd.f32 %v814, %v1257
    %v1260 = vxor.u32 %v1259, 2147483648
    %v1261 = vmul.f32 %v1260, 1.442695
    %v1262 = vpow.pop %v1261
    %v1263 = vadd.f32 %v1262, 1.0
    %v1264 = vrcp.pop %v1263
    %v1265 = vmul.f32 %v1263, %v1264
    %v1266 = vsub.f32 1.0, %v1265
    %v1267 = vmul.f32 %v1264, %v1266
    %v1268 = vadd.f32 %v1264, %v1267
    %vm1269 = vweird.f32 %v1263
    %vm1270 = vweird.f32 %v1264
    %vm1271 = vmor %vm1269, %vm1270
    %v1272 = vsel %vm1271, %v1264, %v1268
    %v1273 = vand.u32 2147483647, %v1263
    %vm1274 = vcmp.eq.f32.partialorder %v1273, 8.507059e+37
    %v1275 = vand.u32 %v1263, 2147483648
    %v1276 = vor.u32 1.1754944e-38, %v1275
    %v1277 = vsel %vm1274, %v1276, %v1272
    %v1278 = vmul.f32 1.0, %v1277
    %v1279 = vadd.f32 %v1257, %v865
    %1281 = vrot.lane.b32.xlu0 %v1279, 64
    %v1282 = vpop.permute.xlu0 %1281
    %v1284 = vmul.f32 %v1278, %v1282
    %1286 = vrot.lane.b32.xlu0 %v1284, 64
    %v1287 = vpop.permute.xlu0 %1286
    %v1289 = vadd.f32 %v814, %v1287
    %v1290 = vtanh.pop %v1289
    %v1291 = vsub.f32 %v1233, %v1290
    %1293 = vrot.lane.b32.xlu0 %v1291, 96
    %v1294 = vpop.permute.xlu0 %1293
    %v1296 = vmul.f32 %v1278, %v1294
    %1298 = vrot.lane.b32.xlu0 %v1296, 32
    %v1299 = vpop.permute.xlu0 %1298
    %v1301 = vadd.f32 %v1290, %v1299
    %1303 = vrot.lane.b32.xlu0 %v1301, 64
    %v1304 = vpop.permute.xlu0 %1303
    %v1305 = vsel %vm162, %v1304, 0
    %1307 = vmatpush.msra.mxu0 0.0
    %1308 = vmatpush.msra.mxu0 0.0
    %1309 = vmatpush.msra.mxu0 0.0
    %1310 = vmatpush.msra.mxu0 0.0
    %1311 = vmatpush.msra.mxu0 0.0
    %1312 = vmatpush.msra.mxu0 0.0
    %1313 = vmatpush.msra.mxu0 0.0
    %1314 = vmatpush.msra.mxu0 0.0
    %1315 = vmatpush.msra.mxu0 0.0
    %1316 = vmatpush.msra.mxu0 0.0
    %1317 = vmatpush.msra.mxu0 0.0
    %1318 = vmatpush.msra.mxu0 0.0
    %1319 = vmatpush.msra.mxu0 %v746
    %1320 = vmatpush.msra.mxu0 %v745
    %1321 = vmatpush.msra.mxu0 %v744
    %1322 = vmatpush.msra.mxu0 %v743
    %1323 = vmatmul.f32.gmra.mxu0 %v1305
    %v1324 = vpop.f32.mrf.mxu0
    %v1325 = vadd.f32 0.0, %v1324
    %1326 = vdwg.mxu0
    %v1327 = vadd.f32 %v817, %v1325
    %v1328 = vxor.u32 %v1327, 2147483648
    %v1329 = vmul.f32 %v1328, 1.442695
    %v1330 = vpow.pop %v1329
    %v1331 = vadd.f32 %v1330, 1.0
    %v1332 = vrcp.pop %v1331
    %v1333 = vmul.f32 %v1331, %v1332
    %v1334 = vsub.f32 1.0, %v1333
    %v1335 = vmul.f32 %v1332, %v1334
    %v1336 = vadd.f32 %v1332, %v1335
    %vm1337 = vweird.f32 %v1331
    %vm1338 = vweird.f32 %v1332
    %vm1339 = vmor %vm1337, %vm1338
    %v1340 = vsel %vm1339, %v1332, %v1336
    %v1341 = vand.u32 2147483647, %v1331
    %vm1342 = vcmp.eq.f32.partialorder %v1341, 8.507059e+37
    %v1343 = vand.u32 %v1331, 2147483648
    %v1344 = vor.u32 1.1754944e-38, %v1343
    %v1345 = vsel %vm1342, %v1344, %v1340
    %v1346 = vmul.f32 1.0, %v1345
    %v1347 = vadd.f32 %v1325, %v865
    %1349 = vrot.lane.b32.xlu0 %v1347, 64
    %v1350 = vpop.permute.xlu0 %1349
    %v1352 = vmul.f32 %v1346, %v1350
    %1354 = vrot.lane.b32.xlu0 %v1352, 64
    %v1355 = vpop.permute.xlu0 %1354
    %v1357 = vadd.f32 %v817, %v1355
    %v1358 = vtanh.pop %v1357
    %v1359 = vsub.f32 %v1301, %v1358
    %1361 = vrot.lane.b32.xlu0 %v1359, 96
    %v1362 = vpop.permute.xlu0 %1361
    %v1364 = vmul.f32 %v1346, %v1362
    %1366 = vrot.lane.b32.xlu0 %v1364, 32
    %v1367 = vpop.permute.xlu0 %1366
    %v1369 = vadd.f32 %v1358, %v1367
    %v1370 = vld [vmem:[%s10] sm:$0xff]
    %v1371 = vld [vmem:[%s10 + $0x8] sm:$0xff]
    %v1372 = vld [vmem:[%s10 + $0x10] sm:$0xff]
    %v1373 = vld [vmem:[%s10 + $0x18] sm:$0xff]
    %v1374 = vld [vmem:[%s11] sm:$0x1]
    %v1376 = vperm.slane %v1374, 0
    %1379 = vrot.lane.b32.xlu0 %v1369, 64
    %v1380 = vpop.permute.xlu0 %1379
    %v1381 = vsel %vm162, %v1380, 0
    %1383 = vmatpush.msra.mxu0 0.0
    %1384 = vmatpush.msra.mxu0 0.0
    %1385 = vmatpush.msra.mxu0 0.0
    %1386 = vmatpush.msra.mxu0 0.0
    %1387 = vmatpush.msra.mxu0 0.0
    %1388 = vmatpush.msra.mxu0 0.0
    %1389 = vmatpush.msra.mxu0 0.0
    %1390 = vmatpush.msra.mxu0 0.0
    %1391 = vmatpush.msra.mxu0 0.0
    %1392 = vmatpush.msra.mxu0 0.0
    %1393 = vmatpush.msra.mxu0 0.0
    %1394 = vmatpush.msra.mxu0 0.0
    %1395 = vmatpush.msra.mxu0 %v1373
    %1396 = vmatpush.msra.mxu0 %v1372
    %1397 = vmatpush.msra.mxu0 %v1371
    %1398 = vmatpush.msra.mxu0 %v1370
    %1399 = vmatmul.f32.gmra.mxu0 %v1381
    %v1400 = vpop.f32.mrf.mxu0
    %v1401 = vadd.f32 %v1376, %v1400
    %1402 = vdwg.mxu0
    %vm1403 = vcmp.gt.f32.partialorder %v1401, 20.0
    %v1404 = vmin.f32 %v1401, 20.0
    %v1405 = vmul.f32 %v1404, 1.442695
    %v1406 = vpow.pop %v1405
    %v1407 = vadd.f32 %v1406, 1.0
    %v1408 = vlog2.pop %v1407
    %v1409 = vmul.f32 %v1408, 0.6931472
    %v1410 = vmul.f32 -0.5, %v1406
    %v1411 = vadd.f32 %v1410, 1.0
    %v1412 = vmul.f32 %v1411, %v1406
    %v1413 = vand.u32 2147483647, %v1406
    %vm1414 = vcmp.lt.f32.partialorder %v1413, 0.0004427343
    %v1415 = vsel %vm1414, %v1412, %v1409
    %v1416 = vsel %vm1403, %v1401, %v1415
    %vm1417 = vcmask 23552
    %1418 = vst.msk [vmem:[%s12] sm:$0xff] %vm1417, %v1416
    // Predicated region
    $region58: #{tpu_custom_call.1} parent=1 // pred_check
      _
    $region59: #{tpu_custom_call.1} parent=1 // pred_check_branch
      %1420 = sbr.rel (0) target = $region61
    $region60: #{tpu_custom_call.1} parent=1 // pred_region
      _
    $region61: #{tpu_custom_call.1} parent=1 // pred_fallthru
      _
    // Predicated region
    $region62: #{tpu_custom_call.1} parent=1 // pred_check
      _
    $region63: #{tpu_custom_call.1} parent=1 // pred_check_branch
      %1422 = sbr.rel (0) target = $region65
    $region64: #{tpu_custom_call.1} parent=1 // pred_region
      _
    $region65: #{tpu_custom_call.1} parent=1 // pred_fallthru
      _
    %1423 = vsyncpa [#allocation4], 1
    %1424 = vsyncpa [#allocation6], 1

</llo_original>
